<compile_context>
chip_gen: v7x
topology: tpu7x:2x2x1
jax: 0.10.0
libtpu: 0.0.40
codegen_flags: <defaults>
</compile_context>

<pallas_src>
import functools

import jax
import jax.numpy as jnp
import numpy as np
from jax import lax
from jax.experimental import pallas as pl
from jax.experimental.pallas import tpu as pltpu


# Packed per-channel parameter columns (shape (C, _P_COLS)).
_P_LCW = 0     # [0, 49)  depthwise 7x7 weights, k = ky*7 + kx
_P_EDW = 49    # [49, 58) edge depthwise 3x3 weights, k = ky*3 + kx
_P_LCB = 58    # local_context bias
_P_EDB = 59    # edge depthwise bias
_P_B1 = 60     # contrast conv1 bias (BN1 folded)
_P_B2 = 61     # contrast conv2 bias (BN2 folded)
_P_W3 = 62     # contrast conv3 (C->1) weights as a column
_P_EPW = 63    # edge pointwise (C->1) weights as a column
_P_B3 = 64     # contrast conv3 bias (scalar, replicated)
_P_EPB = 65    # edge pointwise bias (scalar, replicated)
_P_COLS = 66


def _lcea_kernel(W, HWp, x_ref, dym_ref, dxm_ref, p_ref,
                 w1x_ref, w1l_ref, w2_ref, o_ref):
    x = x_ref[0]                # (C, HWp)
    dym = dym_ref[...]          # (7, HWp) row-offset validity, offsets -3..+3
    dxm = dxm_ref[...]          # (7, HWp) col-offset validity, offsets -3..+3
    P = p_ref[...]              # (C, _P_COLS)

    def shift(a, s):
        # out[:, f] = a[:, (f + s) mod HWp]   (s static; invalid taps masked)
        k = (-s) % HWp
        return a if k == 0 else pltpu.roll(a, shift=k, axis=1)

    def depthwise(rows, wgt, bias, off, K):
        # rows[i] is already shift(x, (i-K//2)*W) * dym[row] (pre-masked).
        R = K // 2
        acc = None
        for j in range(K):               # kx; column offset dx = j - R
            s = None
            for i in range(K):           # ky
                t = wgt[:, i * K + j:i * K + j + 1] * rows[i]
                s = t if s is None else s + t
            c = dxm[off + j:off + j + 1, :] * shift(s, j - R)
            acc = c if acc is None else acc + c
        return acc + bias

    lc_w = P[:, _P_LCW:_P_LCW + 49]
    ed_w = P[:, _P_EDW:_P_EDW + 9]
    lc_b = P[:, _P_LCB:_P_LCB + 1]
    ed_b = P[:, _P_EDB:_P_EDB + 1]
    b1 = P[:, _P_B1:_P_B1 + 1]
    b2 = P[:, _P_B2:_P_B2 + 1]
    w3 = P[:, _P_W3:_P_W3 + 1]
    epw = P[:, _P_EPW:_P_EPW + 1]
    b3 = P[0:1, _P_B3:_P_B3 + 1]
    epb = P[0:1, _P_EPB:_P_EPB + 1]

    # Pre-masked row-shifted copies of x, shared by both depthwise convs.
    xrows = [shift(x, (i - 3) * W) * dym[i:i + 1, :] for i in range(7)]

    # ---- local_context: depthwise 7x7 conv + bias -------------------------
    lf = depthwise(xrows, lc_w, lc_b, off=0, K=7)

    # ---- contrast_calc -----------------------------------------------------
    # 1x1 conv (2C->C) on cat([x, local_feat]); BN1 folded into w1x/w1l/b1.
    h1 = jnp.maximum(
        jnp.dot(w1x_ref[...], x, preferred_element_type=jnp.float32)
        + jnp.dot(w1l_ref[...], lf, preferred_element_type=jnp.float32)
        + b1, 0.0)
    # 3x3 conv (C->C) with BN2 folded: 9 MXU matmuls over row-shifted copies,
    # column shift + mask factored per kx.
    h1rows = [shift(h1, (i - 1) * W) * dym[2 + i:3 + i, :] for i in range(3)]
    acc2 = None
    for j in range(3):                   # kx; dx = j - 1
        s = None
        for i in range(3):               # ky
            t = jnp.dot(w2_ref[i * 3 + j], h1rows[i],
                        preferred_element_type=jnp.float32)
            s = t if s is None else s + t
        c = dxm[2 + j:3 + j, :] * shift(s, j - 1)
        acc2 = c if acc2 is None else acc2 + c
    h2 = jnp.maximum(acc2 + b2, 0.0)
    # 1x1 conv (C->1) + sigmoid -> contrast map (1, HWp).
    contrast = jax.nn.sigmoid(jnp.sum(w3 * h2, axis=0, keepdims=True) + b3)

    # ---- edge_detector: depthwise 3x3 -> 1x1 (C->1) -> sigmoid -------------
    e1 = depthwise(xrows[2:5], ed_w, ed_b, off=2, K=3)
    edge = jax.nn.sigmoid(jnp.sum(epw * e1, axis=0, keepdims=True) + epb)

    # ---- folded attention: out = x * (contrast * (1 + edge)) ---------------
    o_ref[0] = x * (contrast * (1.0 + edge))


def local_contrast_enhanced_attention(x, params, eps=1e-5):
    """x: (B, C, H, W) float32 NCHW (PyTorch convention)."""
    B, C, H, W = x.shape
    HW = H * W
    HWp = ((HW + 127) // 128) * 128          # lane-dense padding

    x2 = x.reshape(B, C, HW).astype(jnp.float32)
    if HWp != HW:
        x2 = jnp.pad(x2, ((0, 0), (0, 0), (0, HWp - HW)))

    # Row / column validity masks for offsets -3..+3 (zero on padded lanes).
    f = jnp.arange(HWp, dtype=jnp.int32)
    fy = f // W
    fx = f % W
    lane_ok = f < HW
    dy_m = jnp.stack([((fy + d >= 0) & (fy + d < H) & lane_ok)
                      for d in range(-3, 4)]).astype(jnp.float32)   # (7, HWp)
    dx_m = jnp.stack([((fx + d >= 0) & (fx + d < W) & lane_ok)
                      for d in range(-3, 4)]).astype(jnp.float32)   # (7, HWp)

    f32 = lambda a: jnp.asarray(a, jnp.float32)

    # Fold BatchNorm (eval mode) into the preceding conv weights / biases.
    s1 = f32(params['bn1_g']) / jnp.sqrt(f32(params['bn1_v']) + eps)
    s2 = f32(params['bn2_g']) / jnp.sqrt(f32(params['bn2_v']) + eps)
    W1 = f32(params['cc1_w']).reshape(C, 2 * C)
    w1x = s1[:, None] * W1[:, :C]                                    # (C, C)
    w1l = s1[:, None] * W1[:, C:]                                    # (C, C)
    b1 = s1 * (f32(params['cc1_b']) - f32(params['bn1_m'])) + f32(params['bn1_b'])
    W2f = s2[:, None, None, None] * f32(params['cc2_w'])             # (C, C, 3, 3)
    b2 = s2 * (f32(params['cc2_b']) - f32(params['bn2_m'])) + f32(params['bn2_b'])
    w2r = jnp.stack([W2f[:, :, k // 3, k % 3] for k in range(9)], axis=0)  # (9, C, C)

    # Pack tiny per-channel params + scalars into one (C, _P_COLS) array.
    P = jnp.concatenate([
        f32(params['lc_w']).reshape(C, 49),
        f32(params['ed_dw_w']).reshape(C, 9),
        f32(params['lc_b']).reshape(C, 1),
        f32(params['ed_dw_b']).reshape(C, 1),
        b1.reshape(C, 1),
        b2.reshape(C, 1),
        f32(params['cc3_w']).reshape(C, 1),
        f32(params['ed_pw_w']).reshape(C, 1),
        jnp.full((C, 1), f32(params['cc3_b'])[0], jnp.float32),
        jnp.full((C, 1), f32(params['ed_pw_b'])[0], jnp.float32),
    ], axis=1)                                                        # (C, 66)

    fix2 = lambda shp: pl.BlockSpec(shp, lambda b: (0, 0))
    fix3 = lambda shp: pl.BlockSpec(shp, lambda b: (0, 0, 0))

    out = pl.pallas_call(
        functools.partial(_lcea_kernel, W, HWp),
        out_shape=jax.ShapeDtypeStruct((B, C, HWp), jnp.float32),
        grid_spec=pltpu.PrefetchScalarGridSpec(
            num_scalar_prefetch=0,
            grid=(B,),
            in_specs=[
                pl.BlockSpec((1, C, HWp), lambda b: (b, 0, 0)),   # x
                fix2((7, HWp)),                                   # dy masks
                fix2((7, HWp)),                                   # dx masks
                fix2((C, _P_COLS)),                               # packed params
                fix2((C, C)),                                     # conv1 (x half, BN folded)
                fix2((C, C)),                                     # conv1 (local_feat half)
                fix3((9, C, C)),                                  # conv2 3x3 weights (BN folded)
            ],
            out_specs=pl.BlockSpec((1, C, HWp), lambda b: (b, 0, 0)),
        ),
        compiler_params=pltpu.CompilerParams(
            dimension_semantics=("parallel",)),
    )(x2, dy_m, dx_m, P, w1x, w1l, w2r)

    return out[:, :, :HW].reshape(B, C, H, W)


def reference(x, params, eps=1e-5):
    """Pure-JAX NCHW reference of the PyTorch forward pass (for verification)."""
    C = x.shape[1]
    f32 = lambda a: jnp.asarray(a, jnp.float32)

    def conv(v, w, b, pad, groups=1):
        out = lax.conv_general_dilated(
            v, f32(w), window_strides=(1, 1),
            padding=((pad, pad), (pad, pad)),
            dimension_numbers=('NCHW', 'OIHW', 'NCHW'),
            feature_group_count=groups,
            precision=lax.Precision.HIGHEST)
        return out + f32(b).reshape(1, -1, 1, 1)

    def bn(v, g, bt, m, var):
        s = f32(g) / jnp.sqrt(f32(var) + eps)
        return v * s.reshape(1, -1, 1, 1) + (f32(bt) - f32(m) * s).reshape(1, -1, 1, 1)

    lf = conv(x, params['lc_w'], params['lc_b'], 3, groups=C)
    ci = jnp.concatenate([x, lf], axis=1)
    h1 = jax.nn.relu(bn(conv(ci, params['cc1_w'], params['cc1_b'], 0),
                        params['bn1_g'], params['bn1_b'],
                        params['bn1_m'], params['bn1_v']))
    h2 = jax.nn.relu(bn(conv(h1, params['cc2_w'], params['cc2_b'], 1),
                        params['bn2_g'], params['bn2_b'],
                        params['bn2_m'], params['bn2_v']))
    contrast = jax.nn.sigmoid(conv(h2, params['cc3_w'], params['cc3_b'], 0))
    e1 = conv(x, params['ed_dw_w'], params['ed_dw_b'], 1, groups=C)
    edge = jax.nn.sigmoid(conv(e1, params['ed_pw_w'], params['ed_pw_b'], 0))
    return x * (contrast * (1.0 + edge))


if __name__ == "__main__":
    B, C, H, W = 2, 8, 16, 16
    key = jax.random.PRNGKey(0)
    keys = jax.random.split(key, 24)

    def init(k, shp, s=0.1):
        return (s * jax.random.normal(k, shp)).astype(jnp.float32)

    params = {
        # local_context: depthwise 7x7, groups=C
        'lc_w': init(keys[0], (C, 1, 7, 7), 0.1),
        'lc_b': init(keys[1], (C,), 0.1),
        # contrast_calc: 1x1(2C->C)+BN+ReLU + 3x3(C->C)+BN+ReLU + 1x1(C->1)+sigmoid
        'cc1_w': init(keys[2], (C, 2 * C, 1, 1), 0.2),
        'cc1_b': init(keys[3], (C,), 0.1),
        'bn1_g': 1.0 + init(keys[4], (C,), 0.1),
        'bn1_b': init(keys[5], (C,), 0.1),
        'bn1_m': init(keys[6], (C,), 0.1),
        'bn1_v': 1.0 + 0.5 * jax.nn.sigmoid(jax.random.normal(keys[7], (C,))).astype(jnp.float32),
        'cc2_w': init(keys[8], (C, C, 3, 3), 0.2),
        'cc2_b': init(keys[9], (C,), 0.1),
        'bn2_g': 1.0 + init(keys[10], (C,), 0.1),
        'bn2_b': init(keys[11], (C,), 0.1),
        'bn2_m': init(keys[12], (C,), 0.1),
        'bn2_v': 1.0 + 0.5 * jax.nn.sigmoid(jax.random.normal(keys[13], (C,))).astype(jnp.float32),
        'cc3_w': init(keys[14], (1, C, 1, 1), 0.3),
        'cc3_b': init(keys[15], (1,), 0.1),
        # edge_detector: depthwise 3x3 (groups=C) + 1x1 (C->1) + sigmoid
        'ed_dw_w': init(keys[16], (C, 1, 3, 3), 0.2),
        'ed_dw_b': init(keys[17], (C,), 0.1),
        'ed_pw_w': init(keys[18], (1, C, 1, 1), 0.3),
        'ed_pw_b': init(keys[19], (1,), 0.1),
    }

    x = jax.random.normal(keys[20], (B, C, H, W), dtype=jnp.float32)

    out = jax.block_until_ready(local_contrast_enhanced_attention(x, params))
    ref = jax.block_until_ready(reference(x, params))

    assert out.shape == x.shape and out.dtype == jnp.float32
    np.testing.assert_allclose(np.asarray(out), np.asarray(ref), rtol=2e-3, atol=2e-3)
    print("KERNEL_OK")
</pallas_src>

<mosaic_0001>
module attributes {stable_mosaic.version = 11 : i64} {
  func.func @_lcea_kernel(%arg0: i32, %arg1: memref<1x8x256xf32, #tpu.memory_space<vmem>>, %arg2: memref<7x256xf32, #tpu.memory_space<vmem>>, %arg3: memref<7x256xf32, #tpu.memory_space<vmem>>, %arg4: memref<8x66xf32, #tpu.memory_space<vmem>>, %arg5: memref<8x8xf32, #tpu.memory_space<vmem>>, %arg6: memref<8x8xf32, #tpu.memory_space<vmem>>, %arg7: memref<9x8x8xf32, #tpu.memory_space<vmem>>, %arg8: memref<1x8x256xf32, #tpu.memory_space<vmem>>) attributes {dimension_semantics = [#tpu.dimension_semantics<parallel>], iteration_bounds = array<i64: 2>, scalar_prefetch = 0 : i64, scratch_operands = 0 : i64, tpu.core_type = #tpu.core_type<tc>, window_params = [{transform_indices = @transform_0, window_bounds = array<i64: 1, 8, 256>}, {pipeline_mode = #tpu.pipeline_mode<synchronous>, transform_indices = @transform_1, window_bounds = array<i64: 7, 256>}, {pipeline_mode = #tpu.pipeline_mode<synchronous>, transform_indices = @transform_2, window_bounds = array<i64: 7, 256>}, {pipeline_mode = #tpu.pipeline_mode<synchronous>, transform_indices = @transform_3, window_bounds = array<i64: 8, 66>}, {pipeline_mode = #tpu.pipeline_mode<synchronous>, transform_indices = @transform_4, window_bounds = array<i64: 8, 8>}, {pipeline_mode = #tpu.pipeline_mode<synchronous>, transform_indices = @transform_5, window_bounds = array<i64: 8, 8>}, {pipeline_mode = #tpu.pipeline_mode<synchronous>, transform_indices = @transform_6, window_bounds = array<i64: 9, 8, 8>}, {transform_indices = @transform_7, window_bounds = array<i64: 1, 8, 256>}]} {
    %c0 = arith.constant 0 : index
    %c0_0 = arith.constant 0 : index
    %c0_1 = arith.constant 0 : index
    %0 = vector.load %arg1[%c0, %c0_0, %c0_1] : memref<1x8x256xf32, #tpu.memory_space<vmem>>, vector<1x8x256xf32>
    %1 = vector.shape_cast %0 : vector<1x8x256xf32> to vector<8x256xf32>
    %c0_2 = arith.constant 0 : index
    %c0_3 = arith.constant 0 : index
    %2 = vector.load %arg2[%c0_2, %c0_3] : memref<7x256xf32, #tpu.memory_space<vmem>>, vector<7x256xf32>
    %c0_4 = arith.constant 0 : index
    %c0_5 = arith.constant 0 : index
    %3 = vector.load %arg3[%c0_4, %c0_5] : memref<7x256xf32, #tpu.memory_space<vmem>>, vector<7x256xf32>
    %c0_6 = arith.constant 0 : index
    %c0_7 = arith.constant 0 : index
    %4 = vector.load %arg4[%c0_6, %c0_7] : memref<8x66xf32, #tpu.memory_space<vmem>>, vector<8x66xf32>
    %5 = vector.extract_strided_slice %4 {offsets = [0, 0], sizes = [8, 49], strides = [1, 1]} : vector<8x66xf32> to vector<8x49xf32>
    %6 = vector.extract_strided_slice %4 {offsets = [0, 49], sizes = [8, 9], strides = [1, 1]} : vector<8x66xf32> to vector<8x9xf32>
    %7 = vector.extract_strided_slice %4 {offsets = [0, 58], sizes = [8, 1], strides = [1, 1]} : vector<8x66xf32> to vector<8x1xf32>
    %8 = vector.extract_strided_slice %4 {offsets = [0, 59], sizes = [8, 1], strides = [1, 1]} : vector<8x66xf32> to vector<8x1xf32>
    %9 = vector.extract_strided_slice %4 {offsets = [0, 60], sizes = [8, 1], strides = [1, 1]} : vector<8x66xf32> to vector<8x1xf32>
    %10 = vector.extract_strided_slice %4 {offsets = [0, 61], sizes = [8, 1], strides = [1, 1]} : vector<8x66xf32> to vector<8x1xf32>
    %11 = vector.extract_strided_slice %4 {offsets = [0, 62], sizes = [8, 1], strides = [1, 1]} : vector<8x66xf32> to vector<8x1xf32>
    %12 = vector.extract_strided_slice %4 {offsets = [0, 63], sizes = [8, 1], strides = [1, 1]} : vector<8x66xf32> to vector<8x1xf32>
    %13 = vector.extract_strided_slice %4 {offsets = [0, 64], sizes = [1, 1], strides = [1, 1]} : vector<8x66xf32> to vector<1x1xf32>
    %14 = vector.extract_strided_slice %4 {offsets = [0, 65], sizes = [1, 1], strides = [1, 1]} : vector<8x66xf32> to vector<1x1xf32>
    %c48_i32 = arith.constant 48 : i32
    %15 = tpu.dynamic_rotate %1 by %c48_i32 dim 1 : vector<8x256xf32>, i32 -> vector<8x256xf32>
    %16 = vector.extract_strided_slice %2 {offsets = [0, 0], sizes = [1, 256], strides = [1, 1]} : vector<7x256xf32> to vector<1x256xf32>
    %17 = vector.broadcast %16 : vector<1x256xf32> to vector<8x256xf32>
    %18 = arith.mulf %15, %17 : vector<8x256xf32>
    %c32_i32 = arith.constant 32 : i32
    %19 = tpu.dynamic_rotate %1 by %c32_i32 dim 1 : vector<8x256xf32>, i32 -> vector<8x256xf32>
    %20 = vector.extract_strided_slice %2 {offsets = [1, 0], sizes = [1, 256], strides = [1, 1]} : vector<7x256xf32> to vector<1x256xf32>
    %21 = vector.broadcast %20 : vector<1x256xf32> to vector<8x256xf32>
    %22 = arith.mulf %19, %21 : vector<8x256xf32>
    %c16_i32 = arith.constant 16 : i32
    %23 = tpu.dynamic_rotate %1 by %c16_i32 dim 1 : vector<8x256xf32>, i32 -> vector<8x256xf32>
    %24 = vector.extract_strided_slice %2 {offsets = [2, 0], sizes = [1, 256], strides = [1, 1]} : vector<7x256xf32> to vector<1x256xf32>
    %25 = vector.broadcast %24 : vector<1x256xf32> to vector<8x256xf32>
    %26 = arith.mulf %23, %25 : vector<8x256xf32>
    %27 = vector.extract_strided_slice %2 {offsets = [3, 0], sizes = [1, 256], strides = [1, 1]} : vector<7x256xf32> to vector<1x256xf32>
    %28 = vector.broadcast %27 : vector<1x256xf32> to vector<8x256xf32>
    %29 = arith.mulf %1, %28 : vector<8x256xf32>
    %c240_i32 = arith.constant 240 : i32
    %30 = tpu.dynamic_rotate %1 by %c240_i32 dim 1 : vector<8x256xf32>, i32 -> vector<8x256xf32>
    %31 = vector.extract_strided_slice %2 {offsets = [4, 0], sizes = [1, 256], strides = [1, 1]} : vector<7x256xf32> to vector<1x256xf32>
    %32 = vector.broadcast %31 : vector<1x256xf32> to vector<8x256xf32>
    %33 = arith.mulf %30, %32 : vector<8x256xf32>
    %c224_i32 = arith.constant 224 : i32
    %34 = tpu.dynamic_rotate %1 by %c224_i32 dim 1 : vector<8x256xf32>, i32 -> vector<8x256xf32>
    %35 = vector.extract_strided_slice %2 {offsets = [5, 0], sizes = [1, 256], strides = [1, 1]} : vector<7x256xf32> to vector<1x256xf32>
    %36 = vector.broadcast %35 : vector<1x256xf32> to vector<8x256xf32>
    %37 = arith.mulf %34, %36 : vector<8x256xf32>
    %c208_i32 = arith.constant 208 : i32
    %38 = tpu.dynamic_rotate %1 by %c208_i32 dim 1 : vector<8x256xf32>, i32 -> vector<8x256xf32>
    %39 = vector.extract_strided_slice %2 {offsets = [6, 0], sizes = [1, 256], strides = [1, 1]} : vector<7x256xf32> to vector<1x256xf32>
    %40 = vector.broadcast %39 : vector<1x256xf32> to vector<8x256xf32>
    %41 = arith.mulf %38, %40 : vector<8x256xf32>
    %42 = vector.extract_strided_slice %5 {offsets = [0, 0], sizes = [8, 1], strides = [1, 1]} : vector<8x49xf32> to vector<8x1xf32>
    %43 = vector.broadcast %42 : vector<8x1xf32> to vector<8x256xf32>
    %44 = arith.mulf %43, %18 : vector<8x256xf32>
    %45 = vector.extract_strided_slice %5 {offsets = [0, 7], sizes = [8, 1], strides = [1, 1]} : vector<8x49xf32> to vector<8x1xf32>
    %46 = vector.broadcast %45 : vector<8x1xf32> to vector<8x256xf32>
    %47 = arith.mulf %46, %22 : vector<8x256xf32>
    %48 = arith.addf %44, %47 : vector<8x256xf32>
    %49 = vector.extract_strided_slice %5 {offsets = [0, 14], sizes = [8, 1], strides = [1, 1]} : vector<8x49xf32> to vector<8x1xf32>
    %50 = vector.broadcast %49 : vector<8x1xf32> to vector<8x256xf32>
    %51 = arith.mulf %50, %26 : vector<8x256xf32>
    %52 = arith.addf %48, %51 : vector<8x256xf32>
    %53 = vector.extract_strided_slice %5 {offsets = [0, 21], sizes = [8, 1], strides = [1, 1]} : vector<8x49xf32> to vector<8x1xf32>
    %54 = vector.broadcast %53 : vector<8x1xf32> to vector<8x256xf32>
    %55 = arith.mulf %54, %29 : vector<8x256xf32>
    %56 = arith.addf %52, %55 : vector<8x256xf32>
    %57 = vector.extract_strided_slice %5 {offsets = [0, 28], sizes = [8, 1], strides = [1, 1]} : vector<8x49xf32> to vector<8x1xf32>
    %58 = vector.broadcast %57 : vector<8x1xf32> to vector<8x256xf32>
    %59 = arith.mulf %58, %33 : vector<8x256xf32>
    %60 = arith.addf %56, %59 : vector<8x256xf32>
    %61 = vector.extract_strided_slice %5 {offsets = [0, 35], sizes = [8, 1], strides = [1, 1]} : vector<8x49xf32> to vector<8x1xf32>
    %62 = vector.broadcast %61 : vector<8x1xf32> to vector<8x256xf32>
    %63 = arith.mulf %62, %37 : vector<8x256xf32>
    %64 = arith.addf %60, %63 : vector<8x256xf32>
    %65 = vector.extract_strided_slice %5 {offsets = [0, 42], sizes = [8, 1], strides = [1, 1]} : vector<8x49xf32> to vector<8x1xf32>
    %66 = vector.broadcast %65 : vector<8x1xf32> to vector<8x256xf32>
    %67 = arith.mulf %66, %41 : vector<8x256xf32>
    %68 = arith.addf %64, %67 : vector<8x256xf32>
    %69 = vector.extract_strided_slice %3 {offsets = [0, 0], sizes = [1, 256], strides = [1, 1]} : vector<7x256xf32> to vector<1x256xf32>
    %c3_i32 = arith.constant 3 : i32
    %70 = tpu.dynamic_rotate %68 by %c3_i32 dim 1 : vector<8x256xf32>, i32 -> vector<8x256xf32>
    %71 = vector.broadcast %69 : vector<1x256xf32> to vector<8x256xf32>
    %72 = arith.mulf %71, %70 : vector<8x256xf32>
    %73 = vector.extract_strided_slice %5 {offsets = [0, 1], sizes = [8, 1], strides = [1, 1]} : vector<8x49xf32> to vector<8x1xf32>
    %74 = vector.broadcast %73 : vector<8x1xf32> to vector<8x256xf32>
    %75 = arith.mulf %74, %18 : vector<8x256xf32>
    %76 = vector.extract_strided_slice %5 {offsets = [0, 8], sizes = [8, 1], strides = [1, 1]} : vector<8x49xf32> to vector<8x1xf32>
    %77 = vector.broadcast %76 : vector<8x1xf32> to vector<8x256xf32>
    %78 = arith.mulf %77, %22 : vector<8x256xf32>
    %79 = arith.addf %75, %78 : vector<8x256xf32>
    %80 = vector.extract_strided_slice %5 {offsets = [0, 15], sizes = [8, 1], strides = [1, 1]} : vector<8x49xf32> to vector<8x1xf32>
    %81 = vector.broadcast %80 : vector<8x1xf32> to vector<8x256xf32>
    %82 = arith.mulf %81, %26 : vector<8x256xf32>
    %83 = arith.addf %79, %82 : vector<8x256xf32>
    %84 = vector.extract_strided_slice %5 {offsets = [0, 22], sizes = [8, 1], strides = [1, 1]} : vector<8x49xf32> to vector<8x1xf32>
    %85 = vector.broadcast %84 : vector<8x1xf32> to vector<8x256xf32>
    %86 = arith.mulf %85, %29 : vector<8x256xf32>
    %87 = arith.addf %83, %86 : vector<8x256xf32>
    %88 = vector.extract_strided_slice %5 {offsets = [0, 29], sizes = [8, 1], strides = [1, 1]} : vector<8x49xf32> to vector<8x1xf32>
    %89 = vector.broadcast %88 : vector<8x1xf32> to vector<8x256xf32>
    %90 = arith.mulf %89, %33 : vector<8x256xf32>
    %91 = arith.addf %87, %90 : vector<8x256xf32>
    %92 = vector.extract_strided_slice %5 {offsets = [0, 36], sizes = [8, 1], strides = [1, 1]} : vector<8x49xf32> to vector<8x1xf32>
    %93 = vector.broadcast %92 : vector<8x1xf32> to vector<8x256xf32>
    %94 = arith.mulf %93, %37 : vector<8x256xf32>
    %95 = arith.addf %91, %94 : vector<8x256xf32>
    %96 = vector.extract_strided_slice %5 {offsets = [0, 43], sizes = [8, 1], strides = [1, 1]} : vector<8x49xf32> to vector<8x1xf32>
    %97 = vector.broadcast %96 : vector<8x1xf32> to vector<8x256xf32>
    %98 = arith.mulf %97, %41 : vector<8x256xf32>
    %99 = arith.addf %95, %98 : vector<8x256xf32>
    %100 = vector.extract_strided_slice %3 {offsets = [1, 0], sizes = [1, 256], strides = [1, 1]} : vector<7x256xf32> to vector<1x256xf32>
    %c2_i32 = arith.constant 2 : i32
    %101 = tpu.dynamic_rotate %99 by %c2_i32 dim 1 : vector<8x256xf32>, i32 -> vector<8x256xf32>
    %102 = vector.broadcast %100 : vector<1x256xf32> to vector<8x256xf32>
    %103 = arith.mulf %102, %101 : vector<8x256xf32>
    %104 = arith.addf %72, %103 : vector<8x256xf32>
    %105 = vector.extract_strided_slice %5 {offsets = [0, 2], sizes = [8, 1], strides = [1, 1]} : vector<8x49xf32> to vector<8x1xf32>
    %106 = vector.broadcast %105 : vector<8x1xf32> to vector<8x256xf32>
    %107 = arith.mulf %106, %18 : vector<8x256xf32>
    %108 = vector.extract_strided_slice %5 {offsets = [0, 9], sizes = [8, 1], strides = [1, 1]} : vector<8x49xf32> to vector<8x1xf32>
    %109 = vector.broadcast %108 : vector<8x1xf32> to vector<8x256xf32>
    %110 = arith.mulf %109, %22 : vector<8x256xf32>
    %111 = arith.addf %107, %110 : vector<8x256xf32>
    %112 = vector.extract_strided_slice %5 {offsets = [0, 16], sizes = [8, 1], strides = [1, 1]} : vector<8x49xf32> to vector<8x1xf32>
    %113 = vector.broadcast %112 : vector<8x1xf32> to vector<8x256xf32>
    %114 = arith.mulf %113, %26 : vector<8x256xf32>
    %115 = arith.addf %111, %114 : vector<8x256xf32>
    %116 = vector.extract_strided_slice %5 {offsets = [0, 23], sizes = [8, 1], strides = [1, 1]} : vector<8x49xf32> to vector<8x1xf32>
    %117 = vector.broadcast %116 : vector<8x1xf32> to vector<8x256xf32>
    %118 = arith.mulf %117, %29 : vector<8x256xf32>
    %119 = arith.addf %115, %118 : vector<8x256xf32>
    %120 = vector.extract_strided_slice %5 {offsets = [0, 30], sizes = [8, 1], strides = [1, 1]} : vector<8x49xf32> to vector<8x1xf32>
    %121 = vector.broadcast %120 : vector<8x1xf32> to vector<8x256xf32>
    %122 = arith.mulf %121, %33 : vector<8x256xf32>
    %123 = arith.addf %119, %122 : vector<8x256xf32>
    %124 = vector.extract_strided_slice %5 {offsets = [0, 37], sizes = [8, 1], strides = [1, 1]} : vector<8x49xf32> to vector<8x1xf32>
    %125 = vector.broadcast %124 : vector<8x1xf32> to vector<8x256xf32>
    %126 = arith.mulf %125, %37 : vector<8x256xf32>
    %127 = arith.addf %123, %126 : vector<8x256xf32>
    %128 = vector.extract_strided_slice %5 {offsets = [0, 44], sizes = [8, 1], strides = [1, 1]} : vector<8x49xf32> to vector<8x1xf32>
    %129 = vector.broadcast %128 : vector<8x1xf32> to vector<8x256xf32>
    %130 = arith.mulf %129, %41 : vector<8x256xf32>
    %131 = arith.addf %127, %130 : vector<8x256xf32>
    %132 = vector.extract_strided_slice %3 {offsets = [2, 0], sizes = [1, 256], strides = [1, 1]} : vector<7x256xf32> to vector<1x256xf32>
    %c1_i32 = arith.constant 1 : i32
    %133 = tpu.dynamic_rotate %131 by %c1_i32 dim 1 : vector<8x256xf32>, i32 -> vector<8x256xf32>
    %134 = vector.broadcast %132 : vector<1x256xf32> to vector<8x256xf32>
    %135 = arith.mulf %134, %133 : vector<8x256xf32>
    %136 = arith.addf %104, %135 : vector<8x256xf32>
    %137 = vector.extract_strided_slice %5 {offsets = [0, 3], sizes = [8, 1], strides = [1, 1]} : vector<8x49xf32> to vector<8x1xf32>
    %138 = vector.broadcast %137 : vector<8x1xf32> to vector<8x256xf32>
    %139 = arith.mulf %138, %18 : vector<8x256xf32>
    %140 = vector.extract_strided_slice %5 {offsets = [0, 10], sizes = [8, 1], strides = [1, 1]} : vector<8x49xf32> to vector<8x1xf32>
    %141 = vector.broadcast %140 : vector<8x1xf32> to vector<8x256xf32>
    %142 = arith.mulf %141, %22 : vector<8x256xf32>
    %143 = arith.addf %139, %142 : vector<8x256xf32>
    %144 = vector.extract_strided_slice %5 {offsets = [0, 17], sizes = [8, 1], strides = [1, 1]} : vector<8x49xf32> to vector<8x1xf32>
    %145 = vector.broadcast %144 : vector<8x1xf32> to vector<8x256xf32>
    %146 = arith.mulf %145, %26 : vector<8x256xf32>
    %147 = arith.addf %143, %146 : vector<8x256xf32>
    %148 = vector.extract_strided_slice %5 {offsets = [0, 24], sizes = [8, 1], strides = [1, 1]} : vector<8x49xf32> to vector<8x1xf32>
    %149 = vector.broadcast %148 : vector<8x1xf32> to vector<8x256xf32>
    %150 = arith.mulf %149, %29 : vector<8x256xf32>
    %151 = arith.addf %147, %150 : vector<8x256xf32>
    %152 = vector.extract_strided_slice %5 {offsets = [0, 31], sizes = [8, 1], strides = [1, 1]} : vector<8x49xf32> to vector<8x1xf32>
    %153 = vector.broadcast %152 : vector<8x1xf32> to vector<8x256xf32>
    %154 = arith.mulf %153, %33 : vector<8x256xf32>
    %155 = arith.addf %151, %154 : vector<8x256xf32>
    %156 = vector.extract_strided_slice %5 {offsets = [0, 38], sizes = [8, 1], strides = [1, 1]} : vector<8x49xf32> to vector<8x1xf32>
    %157 = vector.broadcast %156 : vector<8x1xf32> to vector<8x256xf32>
    %158 = arith.mulf %157, %37 : vector<8x256xf32>
    %159 = arith.addf %155, %158 : vector<8x256xf32>
    %160 = vector.extract_strided_slice %5 {offsets = [0, 45], sizes = [8, 1], strides = [1, 1]} : vector<8x49xf32> to vector<8x1xf32>
    %161 = vector.broadcast %160 : vector<8x1xf32> to vector<8x256xf32>
    %162 = arith.mulf %161, %41 : vector<8x256xf32>
    %163 = arith.addf %159, %162 : vector<8x256xf32>
    %164 = vector.extract_strided_slice %3 {offsets = [3, 0], sizes = [1, 256], strides = [1, 1]} : vector<7x256xf32> to vector<1x256xf32>
    %165 = vector.broadcast %164 : vector<1x256xf32> to vector<8x256xf32>
    %166 = arith.mulf %165, %163 : vector<8x256xf32>
    %167 = arith.addf %136, %166 : vector<8x256xf32>
    %168 = vector.extract_strided_slice %5 {offsets = [0, 4], sizes = [8, 1], strides = [1, 1]} : vector<8x49xf32> to vector<8x1xf32>
    %169 = vector.broadcast %168 : vector<8x1xf32> to vector<8x256xf32>
    %170 = arith.mulf %169, %18 : vector<8x256xf32>
    %171 = vector.extract_strided_slice %5 {offsets = [0, 11], sizes = [8, 1], strides = [1, 1]} : vector<8x49xf32> to vector<8x1xf32>
    %172 = vector.broadcast %171 : vector<8x1xf32> to vector<8x256xf32>
    %173 = arith.mulf %172, %22 : vector<8x256xf32>
    %174 = arith.addf %170, %173 : vector<8x256xf32>
    %175 = vector.extract_strided_slice %5 {offsets = [0, 18], sizes = [8, 1], strides = [1, 1]} : vector<8x49xf32> to vector<8x1xf32>
    %176 = vector.broadcast %175 : vector<8x1xf32> to vector<8x256xf32>
    %177 = arith.mulf %176, %26 : vector<8x256xf32>
    %178 = arith.addf %174, %177 : vector<8x256xf32>
    %179 = vector.extract_strided_slice %5 {offsets = [0, 25], sizes = [8, 1], strides = [1, 1]} : vector<8x49xf32> to vector<8x1xf32>
    %180 = vector.broadcast %179 : vector<8x1xf32> to vector<8x256xf32>
    %181 = arith.mulf %180, %29 : vector<8x256xf32>
    %182 = arith.addf %178, %181 : vector<8x256xf32>
    %183 = vector.extract_strided_slice %5 {offsets = [0, 32], sizes = [8, 1], strides = [1, 1]} : vector<8x49xf32> to vector<8x1xf32>
    %184 = vector.broadcast %183 : vector<8x1xf32> to vector<8x256xf32>
    %185 = arith.mulf %184, %33 : vector<8x256xf32>
    %186 = arith.addf %182, %185 : vector<8x256xf32>
    %187 = vector.extract_strided_slice %5 {offsets = [0, 39], sizes = [8, 1], strides = [1, 1]} : vector<8x49xf32> to vector<8x1xf32>
    %188 = vector.broadcast %187 : vector<8x1xf32> to vector<8x256xf32>
    %189 = arith.mulf %188, %37 : vector<8x256xf32>
    %190 = arith.addf %186, %189 : vector<8x256xf32>
    %191 = vector.extract_strided_slice %5 {offsets = [0, 46], sizes = [8, 1], strides = [1, 1]} : vector<8x49xf32> to vector<8x1xf32>
    %192 = vector.broadcast %191 : vector<8x1xf32> to vector<8x256xf32>
    %193 = arith.mulf %192, %41 : vector<8x256xf32>
    %194 = arith.addf %190, %193 : vector<8x256xf32>
    %195 = vector.extract_strided_slice %3 {offsets = [4, 0], sizes = [1, 256], strides = [1, 1]} : vector<7x256xf32> to vector<1x256xf32>
    %c255_i32 = arith.constant 255 : i32
    %196 = tpu.dynamic_rotate %194 by %c255_i32 dim 1 : vector<8x256xf32>, i32 -> vector<8x256xf32>
    %197 = vector.broadcast %195 : vector<1x256xf32> to vector<8x256xf32>
    %198 = arith.mulf %197, %196 : vector<8x256xf32>
    %199 = arith.addf %167, %198 : vector<8x256xf32>
    %200 = vector.extract_strided_slice %5 {offsets = [0, 5], sizes = [8, 1], strides = [1, 1]} : vector<8x49xf32> to vector<8x1xf32>
    %201 = vector.broadcast %200 : vector<8x1xf32> to vector<8x256xf32>
    %202 = arith.mulf %201, %18 : vector<8x256xf32>
    %203 = vector.extract_strided_slice %5 {offsets = [0, 12], sizes = [8, 1], strides = [1, 1]} : vector<8x49xf32> to vector<8x1xf32>
    %204 = vector.broadcast %203 : vector<8x1xf32> to vector<8x256xf32>
    %205 = arith.mulf %204, %22 : vector<8x256xf32>
    %206 = arith.addf %202, %205 : vector<8x256xf32>
    %207 = vector.extract_strided_slice %5 {offsets = [0, 19], sizes = [8, 1], strides = [1, 1]} : vector<8x49xf32> to vector<8x1xf32>
    %208 = vector.broadcast %207 : vector<8x1xf32> to vector<8x256xf32>
    %209 = arith.mulf %208, %26 : vector<8x256xf32>
    %210 = arith.addf %206, %209 : vector<8x256xf32>
    %211 = vector.extract_strided_slice %5 {offsets = [0, 26], sizes = [8, 1], strides = [1, 1]} : vector<8x49xf32> to vector<8x1xf32>
    %212 = vector.broadcast %211 : vector<8x1xf32> to vector<8x256xf32>
    %213 = arith.mulf %212, %29 : vector<8x256xf32>
    %214 = arith.addf %210, %213 : vector<8x256xf32>
    %215 = vector.extract_strided_slice %5 {offsets = [0, 33], sizes = [8, 1], strides = [1, 1]} : vector<8x49xf32> to vector<8x1xf32>
    %216 = vector.broadcast %215 : vector<8x1xf32> to vector<8x256xf32>
    %217 = arith.mulf %216, %33 : vector<8x256xf32>
    %218 = arith.addf %214, %217 : vector<8x256xf32>
    %219 = vector.extract_strided_slice %5 {offsets = [0, 40], sizes = [8, 1], strides = [1, 1]} : vector<8x49xf32> to vector<8x1xf32>
    %220 = vector.broadcast %219 : vector<8x1xf32> to vector<8x256xf32>
    %221 = arith.mulf %220, %37 : vector<8x256xf32>
    %222 = arith.addf %218, %221 : vector<8x256xf32>
    %223 = vector.extract_strided_slice %5 {offsets = [0, 47], sizes = [8, 1], strides = [1, 1]} : vector<8x49xf32> to vector<8x1xf32>
    %224 = vector.broadcast %223 : vector<8x1xf32> to vector<8x256xf32>
    %225 = arith.mulf %224, %41 : vector<8x256xf32>
    %226 = arith.addf %222, %225 : vector<8x256xf32>
    %227 = vector.extract_strided_slice %3 {offsets = [5, 0], sizes = [1, 256], strides = [1, 1]} : vector<7x256xf32> to vector<1x256xf32>
    %c254_i32 = arith.constant 254 : i32
    %228 = tpu.dynamic_rotate %226 by %c254_i32 dim 1 : vector<8x256xf32>, i32 -> vector<8x256xf32>
    %229 = vector.broadcast %227 : vector<1x256xf32> to vector<8x256xf32>
    %230 = arith.mulf %229, %228 : vector<8x256xf32>
    %231 = arith.addf %199, %230 : vector<8x256xf32>
    %232 = vector.extract_strided_slice %5 {offsets = [0, 6], sizes = [8, 1], strides = [1, 1]} : vector<8x49xf32> to vector<8x1xf32>
    %233 = vector.broadcast %232 : vector<8x1xf32> to vector<8x256xf32>
    %234 = arith.mulf %233, %18 : vector<8x256xf32>
    %235 = vector.extract_strided_slice %5 {offsets = [0, 13], sizes = [8, 1], strides = [1, 1]} : vector<8x49xf32> to vector<8x1xf32>
    %236 = vector.broadcast %235 : vector<8x1xf32> to vector<8x256xf32>
    %237 = arith.mulf %236, %22 : vector<8x256xf32>
    %238 = arith.addf %234, %237 : vector<8x256xf32>
    %239 = vector.extract_strided_slice %5 {offsets = [0, 20], sizes = [8, 1], strides = [1, 1]} : vector<8x49xf32> to vector<8x1xf32>
    %240 = vector.broadcast %239 : vector<8x1xf32> to vector<8x256xf32>
    %241 = arith.mulf %240, %26 : vector<8x256xf32>
    %242 = arith.addf %238, %241 : vector<8x256xf32>
    %243 = vector.extract_strided_slice %5 {offsets = [0, 27], sizes = [8, 1], strides = [1, 1]} : vector<8x49xf32> to vector<8x1xf32>
    %244 = vector.broadcast %243 : vector<8x1xf32> to vector<8x256xf32>
    %245 = arith.mulf %244, %29 : vector<8x256xf32>
    %246 = arith.addf %242, %245 : vector<8x256xf32>
    %247 = vector.extract_strided_slice %5 {offsets = [0, 34], sizes = [8, 1], strides = [1, 1]} : vector<8x49xf32> to vector<8x1xf32>
    %248 = vector.broadcast %247 : vector<8x1xf32> to vector<8x256xf32>
    %249 = arith.mulf %248, %33 : vector<8x256xf32>
    %250 = arith.addf %246, %249 : vector<8x256xf32>
    %251 = vector.extract_strided_slice %5 {offsets = [0, 41], sizes = [8, 1], strides = [1, 1]} : vector<8x49xf32> to vector<8x1xf32>
    %252 = vector.broadcast %251 : vector<8x1xf32> to vector<8x256xf32>
    %253 = arith.mulf %252, %37 : vector<8x256xf32>
    %254 = arith.addf %250, %253 : vector<8x256xf32>
    %255 = vector.extract_strided_slice %5 {offsets = [0, 48], sizes = [8, 1], strides = [1, 1]} : vector<8x49xf32> to vector<8x1xf32>
    %256 = vector.broadcast %255 : vector<8x1xf32> to vector<8x256xf32>
    %257 = arith.mulf %256, %41 : vector<8x256xf32>
    %258 = arith.addf %254, %257 : vector<8x256xf32>
    %259 = vector.extract_strided_slice %3 {offsets = [6, 0], sizes = [1, 256], strides = [1, 1]} : vector<7x256xf32> to vector<1x256xf32>
    %c253_i32 = arith.constant 253 : i32
    %260 = tpu.dynamic_rotate %258 by %c253_i32 dim 1 : vector<8x256xf32>, i32 -> vector<8x256xf32>
    %261 = vector.broadcast %259 : vector<1x256xf32> to vector<8x256xf32>
    %262 = arith.mulf %261, %260 : vector<8x256xf32>
    %263 = arith.addf %231, %262 : vector<8x256xf32>
    %264 = vector.broadcast %7 : vector<8x1xf32> to vector<8x256xf32>
    %265 = arith.addf %263, %264 : vector<8x256xf32>
    %c0_8 = arith.constant 0 : index
    %c0_9 = arith.constant 0 : index
    %266 = vector.load %arg5[%c0_8, %c0_9] : memref<8x8xf32, #tpu.memory_space<vmem>>, vector<8x8xf32>
    %cst = arith.constant dense<0.000000e+00> : vector<8x256xf32>
    %267 = tpu.matmul %266, %1, %cst {dimension_numbers = #tpu.dot_dimension_numbers<[1], [0], [0], [1], [0, 0, 1, 1], [], []>} : vector<8x8xf32>, vector<8x256xf32>, vector<8x256xf32> -> vector<8x256xf32>
    %c0_10 = arith.constant 0 : index
    %c0_11 = arith.constant 0 : index
    %268 = vector.load %arg6[%c0_10, %c0_11] : memref<8x8xf32, #tpu.memory_space<vmem>>, vector<8x8xf32>
    %cst_12 = arith.constant dense<0.000000e+00> : vector<8x256xf32>
    %269 = tpu.matmul %268, %265, %cst_12 {dimension_numbers = #tpu.dot_dimension_numbers<[1], [0], [0], [1], [0, 0, 1, 1], [], []>} : vector<8x8xf32>, vector<8x256xf32>, vector<8x256xf32> -> vector<8x256xf32>
    %270 = arith.addf %267, %269 : vector<8x256xf32>
    %271 = vector.broadcast %9 : vector<8x1xf32> to vector<8x256xf32>
    %272 = arith.addf %270, %271 : vector<8x256xf32>
    %cst_13 = arith.constant 0.000000e+00 : f32
    %273 = vector.broadcast %cst_13 : f32 to vector<8x256xf32>
    %274 = arith.maximumf %272, %273 : vector<8x256xf32>
    %c16_i32_14 = arith.constant 16 : i32
    %275 = tpu.dynamic_rotate %274 by %c16_i32_14 dim 1 : vector<8x256xf32>, i32 -> vector<8x256xf32>
    %276 = vector.extract_strided_slice %2 {offsets = [2, 0], sizes = [1, 256], strides = [1, 1]} : vector<7x256xf32> to vector<1x256xf32>
    %277 = vector.broadcast %276 : vector<1x256xf32> to vector<8x256xf32>
    %278 = arith.mulf %275, %277 : vector<8x256xf32>
    %279 = vector.extract_strided_slice %2 {offsets = [3, 0], sizes = [1, 256], strides = [1, 1]} : vector<7x256xf32> to vector<1x256xf32>
    %280 = vector.broadcast %279 : vector<1x256xf32> to vector<8x256xf32>
    %281 = arith.mulf %274, %280 : vector<8x256xf32>
    %c240_i32_15 = arith.constant 240 : i32
    %282 = tpu.dynamic_rotate %274 by %c240_i32_15 dim 1 : vector<8x256xf32>, i32 -> vector<8x256xf32>
    %283 = vector.extract_strided_slice %2 {offsets = [4, 0], sizes = [1, 256], strides = [1, 1]} : vector<7x256xf32> to vector<1x256xf32>
    %284 = vector.broadcast %283 : vector<1x256xf32> to vector<8x256xf32>
    %285 = arith.mulf %282, %284 : vector<8x256xf32>
    %c0_16 = arith.constant 0 : index
    %c0_17 = arith.constant 0 : index
    %c0_18 = arith.constant 0 : index
    %286 = vector.load %arg7[%c0_16, %c0_17, %c0_18] : memref<9x8x8xf32, #tpu.memory_space<vmem>>, vector<1x8x8xf32>
    %287 = vector.shape_cast %286 : vector<1x8x8xf32> to vector<8x8xf32>
    %cst_19 = arith.constant dense<0.000000e+00> : vector<8x256xf32>
    %288 = tpu.matmul %287, %278, %cst_19 {dimension_numbers = #tpu.dot_dimension_numbers<[1], [0], [0], [1], [0, 0, 1, 1], [], []>} : vector<8x8xf32>, vector<8x256xf32>, vector<8x256xf32> -> vector<8x256xf32>
    %c3 = arith.constant 3 : index
    %c0_20 = arith.constant 0 : index
    %c0_21 = arith.constant 0 : index
    %289 = vector.load %arg7[%c3, %c0_20, %c0_21] : memref<9x8x8xf32, #tpu.memory_space<vmem>>, vector<1x8x8xf32>
    %290 = vector.shape_cast %289 : vector<1x8x8xf32> to vector<8x8xf32>
    %cst_22 = arith.constant dense<0.000000e+00> : vector<8x256xf32>
    %291 = tpu.matmul %290, %281, %cst_22 {dimension_numbers = #tpu.dot_dimension_numbers<[1], [0], [0], [1], [0, 0, 1, 1], [], []>} : vector<8x8xf32>, vector<8x256xf32>, vector<8x256xf32> -> vector<8x256xf32>
    %292 = arith.addf %288, %291 : vector<8x256xf32>
    %c6 = arith.constant 6 : index
    %c0_23 = arith.constant 0 : index
    %c0_24 = arith.constant 0 : index
    %293 = vector.load %arg7[%c6, %c0_23, %c0_24] : memref<9x8x8xf32, #tpu.memory_space<vmem>>, vector<1x8x8xf32>
    %294 = vector.shape_cast %293 : vector<1x8x8xf32> to vector<8x8xf32>
    %cst_25 = arith.constant dense<0.000000e+00> : vector<8x256xf32>
    %295 = tpu.matmul %294, %285, %cst_25 {dimension_numbers = #tpu.dot_dimension_numbers<[1], [0], [0], [1], [0, 0, 1, 1], [], []>} : vector<8x8xf32>, vector<8x256xf32>, vector<8x256xf32> -> vector<8x256xf32>
    %296 = arith.addf %292, %295 : vector<8x256xf32>
    %297 = vector.extract_strided_slice %3 {offsets = [2, 0], sizes = [1, 256], strides = [1, 1]} : vector<7x256xf32> to vector<1x256xf32>
    %c1_i32_26 = arith.constant 1 : i32
    %298 = tpu.dynamic_rotate %296 by %c1_i32_26 dim 1 : vector<8x256xf32>, i32 -> vector<8x256xf32>
    %299 = vector.broadcast %297 : vector<1x256xf32> to vector<8x256xf32>
    %300 = arith.mulf %299, %298 : vector<8x256xf32>
    %c1 = arith.constant 1 : index
    %c0_27 = arith.constant 0 : index
    %c0_28 = arith.constant 0 : index
    %301 = vector.load %arg7[%c1, %c0_27, %c0_28] : memref<9x8x8xf32, #tpu.memory_space<vmem>>, vector<1x8x8xf32>
    %302 = vector.shape_cast %301 : vector<1x8x8xf32> to vector<8x8xf32>
    %cst_29 = arith.constant dense<0.000000e+00> : vector<8x256xf32>
    %303 = tpu.matmul %302, %278, %cst_29 {dimension_numbers = #tpu.dot_dimension_numbers<[1], [0], [0], [1], [0, 0, 1, 1], [], []>} : vector<8x8xf32>, vector<8x256xf32>, vector<8x256xf32> -> vector<8x256xf32>
    %c4 = arith.constant 4 : index
    %c0_30 = arith.constant 0 : index
    %c0_31 = arith.constant 0 : index
    %304 = vector.load %arg7[%c4, %c0_30, %c0_31] : memref<9x8x8xf32, #tpu.memory_space<vmem>>, vector<1x8x8xf32>
    %305 = vector.shape_cast %304 : vector<1x8x8xf32> to vector<8x8xf32>
    %cst_32 = arith.constant dense<0.000000e+00> : vector<8x256xf32>
    %306 = tpu.matmul %305, %281, %cst_32 {dimension_numbers = #tpu.dot_dimension_numbers<[1], [0], [0], [1], [0, 0, 1, 1], [], []>} : vector<8x8xf32>, vector<8x256xf32>, vector<8x256xf32> -> vector<8x256xf32>
    %307 = arith.addf %303, %306 : vector<8x256xf32>
    %c7 = arith.constant 7 : index
    %c0_33 = arith.constant 0 : index
    %c0_34 = arith.constant 0 : index
    %308 = vector.load %arg7[%c7, %c0_33, %c0_34] : memref<9x8x8xf32, #tpu.memory_space<vmem>>, vector<1x8x8xf32>
    %309 = vector.shape_cast %308 : vector<1x8x8xf32> to vector<8x8xf32>
    %cst_35 = arith.constant dense<0.000000e+00> : vector<8x256xf32>
    %310 = tpu.matmul %309, %285, %cst_35 {dimension_numbers = #tpu.dot_dimension_numbers<[1], [0], [0], [1], [0, 0, 1, 1], [], []>} : vector<8x8xf32>, vector<8x256xf32>, vector<8x256xf32> -> vector<8x256xf32>
    %311 = arith.addf %307, %310 : vector<8x256xf32>
    %312 = vector.extract_strided_slice %3 {offsets = [3, 0], sizes = [1, 256], strides = [1, 1]} : vector<7x256xf32> to vector<1x256xf32>
    %313 = vector.broadcast %312 : vector<1x256xf32> to vector<8x256xf32>
    %314 = arith.mulf %313, %311 : vector<8x256xf32>
    %315 = arith.addf %300, %314 : vector<8x256xf32>
    %c2 = arith.constant 2 : index
    %c0_36 = arith.constant 0 : index
    %c0_37 = arith.constant 0 : index
    %316 = vector.load %arg7[%c2, %c0_36, %c0_37] : memref<9x8x8xf32, #tpu.memory_space<vmem>>, vector<1x8x8xf32>
    %317 = vector.shape_cast %316 : vector<1x8x8xf32> to vector<8x8xf32>
    %cst_38 = arith.constant dense<0.000000e+00> : vector<8x256xf32>
    %318 = tpu.matmul %317, %278, %cst_38 {dimension_numbers = #tpu.dot_dimension_numbers<[1], [0], [0], [1], [0, 0, 1, 1], [], []>} : vector<8x8xf32>, vector<8x256xf32>, vector<8x256xf32> -> vector<8x256xf32>
    %c5 = arith.constant 5 : index
    %c0_39 = arith.constant 0 : index
    %c0_40 = arith.constant 0 : index
    %319 = vector.load %arg7[%c5, %c0_39, %c0_40] : memref<9x8x8xf32, #tpu.memory_space<vmem>>, vector<1x8x8xf32>
    %320 = vector.shape_cast %319 : vector<1x8x8xf32> to vector<8x8xf32>
    %cst_41 = arith.constant dense<0.000000e+00> : vector<8x256xf32>
    %321 = tpu.matmul %320, %281, %cst_41 {dimension_numbers = #tpu.dot_dimension_numbers<[1], [0], [0], [1], [0, 0, 1, 1], [], []>} : vector<8x8xf32>, vector<8x256xf32>, vector<8x256xf32> -> vector<8x256xf32>
    %322 = arith.addf %318, %321 : vector<8x256xf32>
    %c8 = arith.constant 8 : index
    %c0_42 = arith.constant 0 : index
    %c0_43 = arith.constant 0 : index
    %323 = vector.load %arg7[%c8, %c0_42, %c0_43] : memref<9x8x8xf32, #tpu.memory_space<vmem>>, vector<1x8x8xf32>
    %324 = vector.shape_cast %323 : vector<1x8x8xf32> to vector<8x8xf32>
    %cst_44 = arith.constant dense<0.000000e+00> : vector<8x256xf32>
    %325 = tpu.matmul %324, %285, %cst_44 {dimension_numbers = #tpu.dot_dimension_numbers<[1], [0], [0], [1], [0, 0, 1, 1], [], []>} : vector<8x8xf32>, vector<8x256xf32>, vector<8x256xf32> -> vector<8x256xf32>
    %326 = arith.addf %322, %325 : vector<8x256xf32>
    %327 = vector.extract_strided_slice %3 {offsets = [4, 0], sizes = [1, 256], strides = [1, 1]} : vector<7x256xf32> to vector<1x256xf32>
    %c255_i32_45 = arith.constant 255 : i32
    %328 = tpu.dynamic_rotate %326 by %c255_i32_45 dim 1 : vector<8x256xf32>, i32 -> vector<8x256xf32>
    %329 = vector.broadcast %327 : vector<1x256xf32> to vector<8x256xf32>
    %330 = arith.mulf %329, %328 : vector<8x256xf32>
    %331 = arith.addf %315, %330 : vector<8x256xf32>
    %332 = vector.broadcast %10 : vector<8x1xf32> to vector<8x256xf32>
    %333 = arith.addf %331, %332 : vector<8x256xf32>
    %cst_46 = arith.constant 0.000000e+00 : f32
    %334 = vector.broadcast %cst_46 : f32 to vector<8x256xf32>
    %335 = arith.maximumf %333, %334 : vector<8x256xf32>
    %336 = vector.broadcast %11 : vector<8x1xf32> to vector<8x256xf32>
    %337 = arith.mulf %336, %335 : vector<8x256xf32>
    %cst_47 = arith.constant dense<0.000000e+00> : vector<256xf32>
    %338 = vector.multi_reduction <add>, %337, %cst_47 [0] : vector<8x256xf32> to vector<256xf32>
    %339 = vector.shape_cast %338 : vector<256xf32> to vector<1x256xf32>
    %340 = vector.broadcast %13 : vector<1x1xf32> to vector<1x256xf32>
    %341 = arith.addf %339, %340 : vector<1x256xf32>
    %342 = arith.negf %341 : vector<1x256xf32>
    %343 = math.exp %342 : vector<1x256xf32>
    %cst_48 = arith.constant 1.000000e+00 : f32
    %344 = vector.broadcast %cst_48 : f32 to vector<1x256xf32>
    %345 = arith.addf %344, %343 : vector<1x256xf32>
    %346 = arith.divf %344, %345 : vector<1x256xf32>
    %347 = vector.extract_strided_slice %6 {offsets = [0, 0], sizes = [8, 1], strides = [1, 1]} : vector<8x9xf32> to vector<8x1xf32>
    %348 = vector.broadcast %347 : vector<8x1xf32> to vector<8x256xf32>
    %349 = arith.mulf %348, %26 : vector<8x256xf32>
    %350 = vector.extract_strided_slice %6 {offsets = [0, 3], sizes = [8, 1], strides = [1, 1]} : vector<8x9xf32> to vector<8x1xf32>
    %351 = vector.broadcast %350 : vector<8x1xf32> to vector<8x256xf32>
    %352 = arith.mulf %351, %29 : vector<8x256xf32>
    %353 = arith.addf %349, %352 : vector<8x256xf32>
    %354 = vector.extract_strided_slice %6 {offsets = [0, 6], sizes = [8, 1], strides = [1, 1]} : vector<8x9xf32> to vector<8x1xf32>
    %355 = vector.broadcast %354 : vector<8x1xf32> to vector<8x256xf32>
    %356 = arith.mulf %355, %33 : vector<8x256xf32>
    %357 = arith.addf %353, %356 : vector<8x256xf32>
    %358 = vector.extract_strided_slice %3 {offsets = [2, 0], sizes = [1, 256], strides = [1, 1]} : vector<7x256xf32> to vector<1x256xf32>
    %c1_i32_49 = arith.constant 1 : i32
    %359 = tpu.dynamic_rotate %357 by %c1_i32_49 dim 1 : vector<8x256xf32>, i32 -> vector<8x256xf32>
    %360 = vector.broadcast %358 : vector<1x256xf32> to vector<8x256xf32>
    %361 = arith.mulf %360, %359 : vector<8x256xf32>
    %362 = vector.extract_strided_slice %6 {offsets = [0, 1], sizes = [8, 1], strides = [1, 1]} : vector<8x9xf32> to vector<8x1xf32>
    %363 = vector.broadcast %362 : vector<8x1xf32> to vector<8x256xf32>
    %364 = arith.mulf %363, %26 : vector<8x256xf32>
    %365 = vector.extract_strided_slice %6 {offsets = [0, 4], sizes = [8, 1], strides = [1, 1]} : vector<8x9xf32> to vector<8x1xf32>
    %366 = vector.broadcast %365 : vector<8x1xf32> to vector<8x256xf32>
    %367 = arith.mulf %366, %29 : vector<8x256xf32>
    %368 = arith.addf %364, %367 : vector<8x256xf32>
    %369 = vector.extract_strided_slice %6 {offsets = [0, 7], sizes = [8, 1], strides = [1, 1]} : vector<8x9xf32> to vector<8x1xf32>
    %370 = vector.broadcast %369 : vector<8x1xf32> to vector<8x256xf32>
    %371 = arith.mulf %370, %33 : vector<8x256xf32>
    %372 = arith.addf %368, %371 : vector<8x256xf32>
    %373 = vector.extract_strided_slice %3 {offsets = [3, 0], sizes = [1, 256], strides = [1, 1]} : vector<7x256xf32> to vector<1x256xf32>
    %374 = vector.broadcast %373 : vector<1x256xf32> to vector<8x256xf32>
    %375 = arith.mulf %374, %372 : vector<8x256xf32>
    %376 = arith.addf %361, %375 : vector<8x256xf32>
    %377 = vector.extract_strided_slice %6 {offsets = [0, 2], sizes = [8, 1], strides = [1, 1]} : vector<8x9xf32> to vector<8x1xf32>
    %378 = vector.broadcast %377 : vector<8x1xf32> to vector<8x256xf32>
    %379 = arith.mulf %378, %26 : vector<8x256xf32>
    %380 = vector.extract_strided_slice %6 {offsets = [0, 5], sizes = [8, 1], strides = [1, 1]} : vector<8x9xf32> to vector<8x1xf32>
    %381 = vector.broadcast %380 : vector<8x1xf32> to vector<8x256xf32>
    %382 = arith.mulf %381, %29 : vector<8x256xf32>
    %383 = arith.addf %379, %382 : vector<8x256xf32>
    %384 = vector.extract_strided_slice %6 {offsets = [0, 8], sizes = [8, 1], strides = [1, 1]} : vector<8x9xf32> to vector<8x1xf32>
    %385 = vector.broadcast %384 : vector<8x1xf32> to vector<8x256xf32>
    %386 = arith.mulf %385, %33 : vector<8x256xf32>
    %387 = arith.addf %383, %386 : vector<8x256xf32>
    %388 = vector.extract_strided_slice %3 {offsets = [4, 0], sizes = [1, 256], strides = [1, 1]} : vector<7x256xf32> to vector<1x256xf32>
    %c255_i32_50 = arith.constant 255 : i32
    %389 = tpu.dynamic_rotate %387 by %c255_i32_50 dim 1 : vector<8x256xf32>, i32 -> vector<8x256xf32>
    %390 = vector.broadcast %388 : vector<1x256xf32> to vector<8x256xf32>
    %391 = arith.mulf %390, %389 : vector<8x256xf32>
    %392 = arith.addf %376, %391 : vector<8x256xf32>
    %393 = vector.broadcast %8 : vector<8x1xf32> to vector<8x256xf32>
    %394 = arith.addf %392, %393 : vector<8x256xf32>
    %395 = vector.broadcast %12 : vector<8x1xf32> to vector<8x256xf32>
    %396 = arith.mulf %395, %394 : vector<8x256xf32>
    %cst_51 = arith.constant dense<0.000000e+00> : vector<256xf32>
    %397 = vector.multi_reduction <add>, %396, %cst_51 [0] : vector<8x256xf32> to vector<256xf32>
    %398 = vector.shape_cast %397 : vector<256xf32> to vector<1x256xf32>
    %399 = vector.broadcast %14 : vector<1x1xf32> to vector<1x256xf32>
    %400 = arith.addf %398, %399 : vector<1x256xf32>
    %401 = arith.negf %400 : vector<1x256xf32>
    %402 = math.exp %401 : vector<1x256xf32>
    %cst_52 = arith.constant 1.000000e+00 : f32
    %403 = vector.broadcast %cst_52 : f32 to vector<1x256xf32>
    %404 = arith.addf %403, %402 : vector<1x256xf32>
    %405 = arith.divf %403, %404 : vector<1x256xf32>
    %cst_53 = arith.constant 1.000000e+00 : f32
    %406 = vector.broadcast %cst_53 : f32 to vector<1x256xf32>
    %407 = arith.addf %406, %405 : vector<1x256xf32>
    %408 = arith.mulf %346, %407 : vector<1x256xf32>
    %409 = vector.broadcast %408 : vector<1x256xf32> to vector<8x256xf32>
    %410 = arith.mulf %1, %409 : vector<8x256xf32>
    %c0_54 = arith.constant 0 : index
    %c0_55 = arith.constant 0 : index
    %c0_56 = arith.constant 0 : index
    %411 = vector.load %arg8[%c0_54, %c0_55, %c0_56] : memref<1x8x256xf32, #tpu.memory_space<vmem>>, vector<1x8x256xf32>
    %412 = vector.shape_cast %411 : vector<1x8x256xf32> to vector<8x256xf32>
    %413 = vector.shape_cast %410 : vector<8x256xf32> to vector<1x8x256xf32>
    tpu.vector_store %arg8[%c0_54, %c0_55, %c0_56], %413 {strides = array<i32>} : memref<1x8x256xf32, #tpu.memory_space<vmem>>, vector<1x8x256xf32>,
    return
  }
  func.func @transform_0(%arg0: i32) -> (i32, i32, i32) {
    %c0_i32 = arith.constant 0 : i32
    %c0_i32_0 = arith.constant 0 : i32
    %c0_i32_1 = arith.constant 0 : i32
    return %arg0, %c0_i32, %c0_i32_0 : i32, i32, i32
  }
  func.func @transform_1(%arg0: i32) -> (i32, i32) {
    %c0_i32 = arith.constant 0 : i32
    %c0_i32_0 = arith.constant 0 : i32
    %c0_i32_1 = arith.constant 0 : i32
    return %c0_i32, %c0_i32_0 : i32, i32
  }
  func.func @transform_2(%arg0: i32) -> (i32, i32) {
    %c0_i32 = arith.constant 0 : i32
    %c0_i32_0 = arith.constant 0 : i32
    %c0_i32_1 = arith.constant 0 : i32
    return %c0_i32, %c0_i32_0 : i32, i32
  }
  func.func @transform_3(%arg0: i32) -> (i32, i32) {
    %c0_i32 = arith.constant 0 : i32
    %c0_i32_0 = arith.constant 0 : i32
    %c0_i32_1 = arith.constant 0 : i32
    return %c0_i32, %c0_i32_0 : i32, i32
  }
  func.func @transform_4(%arg0: i32) -> (i32, i32) {
    %c0_i32 = arith.constant 0 : i32
    %c0_i32_0 = arith.constant 0 : i32
    %c0_i32_1 = arith.constant 0 : i32
    return %c0_i32, %c0_i32_0 : i32, i32
  }
  func.func @transform_5(%arg0: i32) -> (i32, i32) {
    %c0_i32 = arith.constant 0 : i32
    %c0_i32_0 = arith.constant 0 : i32
    %c0_i32_1 = arith.constant 0 : i32
    return %c0_i32, %c0_i32_0 : i32, i32
  }
  func.func @transform_6(%arg0: i32) -> (i32, i32, i32) {
    %c0_i32 = arith.constant 0 : i32
    %c0_i32_0 = arith.constant 0 : i32
    %c0_i32_1 = arith.constant 0 : i32
    %c0_i32_2 = arith.constant 0 : i32
    return %c0_i32, %c0_i32_0, %c0_i32_1 : i32, i32, i32
  }
  func.func @transform_7(%arg0: i32) -> (i32, i32, i32) {
    %c0_i32 = arith.constant 0 : i32
    %c0_i32_0 = arith.constant 0 : i32
    %c0_i32_1 = arith.constant 0 : i32
    return %arg0, %c0_i32, %c0_i32_0 : i32, i32, i32
  }
}

</mosaic_0001>

<llo_original>
// kernel: tpu_custom_call.1
$region0: #{tpu_custom_call.1}
  #allocation0 [shape = 'u32[]', space=smem, size = 0x4, offset = 0x4, fixed_abs, tag = 'smem constant byte address 0x4 - core index']
  #allocation1 [shape = 'u32[144,128]{1,0:T(1,128)}', space=vmem, size = 0x12000, scoped, tag = 'internal scratch']
  %s0 = inlined_call_operand.vmem [shape: f32[2,8,256], index: 0, kind: input, shape index: {}]
  %s1 = inlined_call_operand.vmem [shape: f32[7,256], index: 1, kind: input, shape index: {}]
  %s2 = inlined_call_operand.vmem [shape: f32[7,256], index: 2, kind: input, shape index: {}]
  %s3 = inlined_call_operand.vmem [shape: f32[8,66], index: 3, kind: input, shape index: {}]
  %s4 = inlined_call_operand.vmem [shape: f32[8,8], index: 4, kind: input, shape index: {}]
  %s5 = inlined_call_operand.vmem [shape: f32[8,8], index: 5, kind: input, shape index: {}]
  %s6 = inlined_call_operand.vmem [shape: f32[9,8,8], index: 6, kind: input, shape index: {}]
  %s7 = inlined_call_operand.hbm [shape: f32[2,8,256], index: 7, kind: output, shape index: {}]
  %s8 = sld [smem:[#allocation0]]
  $region61: #{tpu_custom_call.1} parent=0
    _
  %s10 = ssub.s32 1, %s8
  %s11 = scalar_select 0, %s10, %s8
  $region1: #{tpu_custom_call.1} parent=0
    #allocation2 [shape = 'u8[16384]{0}', space=vmem, size = 0x4000, scoped, tag = 'output window, operand 0']
    #allocation3 [shape = 's32[2]{0}', space=sflag, size = 0x8, scoped, tag = 'scoped memory for tpu_custom_call.1']
    %12 = vsyncpa [#allocation3], 0
    %s13 = scalar_lea.sflag [#allocation3], 1
    %14 = vsyncpa %s13, 0
    loop: start=0, step=1, limit=4
    $region2: #{tpu_custom_call.1} parent=1 // loop_pre_header
      _
    $region3: #{tpu_custom_call.1} parent=1 // loop_header
      %s16 = sphi 0, %s20
      %p17 = scmp.ge.s32.totalorder %s16, 4
      %s26 = sphi 0, %s28
      %s29 = sphi 0, %s26
      %s30 = sphi 0, %s29
      %s46 = sphi 0, %s30
      %s50 = sphi 0, %s50
      %s52 = sphi 0, %s50
      %s53 = sphi 0, %s52
      %s67 = sphi 0, %s53
      %s71 = sphi 0, %s71
      %s73 = sphi 0, %s71
      %s74 = sphi 0, %s73
      %s88 = sphi 0, %s74
      %s92 = sphi 0, %s92
      %s94 = sphi 0, %s92
      %s95 = sphi 0, %s94
      %s109 = sphi 0, %s95
      %s113 = sphi 0, %s113
      %s115 = sphi 0, %s113
      %s116 = sphi 0, %s115
      %s130 = sphi 0, %s116
      %s134 = sphi 0, %s134
      %s136 = sphi 0, %s134
      %s137 = sphi 0, %s136
      %s151 = sphi 0, %s137
      %s155 = sphi 0, %s155
      %s157 = sphi 0, %s155
      %s158 = sphi 0, %s157
      %s172 = sphi 0, %s158
      %s178 = sphi 0, %s180
      %s181 = sphi 0, %s178
      %s182 = sphi 0, %s181
      %s198 = sphi 0, %s182
    $region4: #{tpu_custom_call.1} parent=1 // loop_header_branch
      %19 = sbr.rel (%p17) target = $region8
    $region5: #{tpu_custom_call.1} parent=1 // loop_body
      %s21 = ssub.s32 %s16, 1
      %s22 = ssub.s32 %s16, 2
      %s23 = sadd.s32 %s16, 1
      %s24 = ssub.s32 %s16, %s23
      %p25 = scmp.eq.s32.totalorder %s24, 0
      %s27 = sadd.s32 %s26, 1
      %s28 = scalar_select %p25, %s26, %s27
      %p31 = pneg %p25
      %p32 = scmp.eq.s32.totalorder %s16, 1
      %p33 = por %p31, %p32
      %p34 = scmp.ne.s32.totalorder %s26, %s29
      %p35 = scmp.eq.s32.totalorder %s16, 0
      %p36 = por %p34, %p35
      %p37 = scmp.ne.s32.totalorder %s26, %s29
      %p38 = scmp.eq.s32.totalorder %s21, 1
      %p39 = por %p37, %p38
      %p40 = scmp.ne.s32.totalorder %s29, %s30
      %p41 = scmp.eq.s32.totalorder %s21, 0
      %p42 = por %p40, %p41
      %p43 = scmp.ne.s32.totalorder %s29, %s30
      %p44 = scmp.eq.s32.totalorder %s22, 1
      %p45 = por %p43, %p44
      %p47 = scmp.ne.s32.totalorder %s30, %s46
      %p48 = scmp.eq.s32.totalorder %s22, 0
      %p49 = por %p47, %p48
      %s51 = sadd.s32 %s50, 1
      %p54 = scmp.eq.s32.totalorder %s16, 1
      %p55 = scmp.ne.s32.totalorder %s50, %s52
      %p56 = scmp.eq.s32.totalorder %s16, 0
      %p57 = por %p55, %p56
      %p58 = scmp.ne.s32.totalorder %s50, %s52
      %p59 = scmp.eq.s32.totalorder %s21, 1
      %p60 = por %p58, %p59
      %p61 = scmp.ne.s32.totalorder %s52, %s53
      %p62 = scmp.eq.s32.totalorder %s21, 0
      %p63 = por %p61, %p62
      %p64 = scmp.ne.s32.totalorder %s52, %s53
      %p65 = scmp.eq.s32.totalorder %s22, 1
      %p66 = por %p64, %p65
      %p68 = scmp.ne.s32.totalorder %s53, %s67
      %p69 = scmp.eq.s32.totalorder %s22, 0
      %p70 = por %p68, %p69
      %s72 = sadd.s32 %s71, 1
      %p75 = scmp.eq.s32.totalorder %s16, 1
      %p76 = scmp.ne.s32.totalorder %s71, %s73
      %p77 = scmp.eq.s32.totalorder %s16, 0
      %p78 = por %p76, %p77
      %p79 = scmp.ne.s32.totalorder %s71, %s73
      %p80 = scmp.eq.s32.totalorder %s21, 1
      %p81 = por %p79, %p80
      %p82 = scmp.ne.s32.totalorder %s73, %s74
      %p83 = scmp.eq.s32.totalorder %s21, 0
      %p84 = por %p82, %p83
      %p85 = scmp.ne.s32.totalorder %s73, %s74
      %p86 = scmp.eq.s32.totalorder %s22, 1
      %p87 = por %p85, %p86
      %p89 = scmp.ne.s32.totalorder %s74, %s88
      %p90 = scmp.eq.s32.totalorder %s22, 0
      %p91 = por %p89, %p90
      %s93 = sadd.s32 %s92, 1
      %p96 = scmp.eq.s32.totalorder %s16, 1
      %p97 = scmp.ne.s32.totalorder %s92, %s94
      %p98 = scmp.eq.s32.totalorder %s16, 0
      %p99 = por %p97, %p98
      %p100 = scmp.ne.s32.totalorder %s92, %s94
      %p101 = scmp.eq.s32.totalorder %s21, 1
      %p102 = por %p100, %p101
      %p103 = scmp.ne.s32.totalorder %s94, %s95
      %p104 = scmp.eq.s32.totalorder %s21, 0
      %p105 = por %p103, %p104
      %p106 = scmp.ne.s32.totalorder %s94, %s95
      %p107 = scmp.eq.s32.totalorder %s22, 1
      %p108 = por %p106, %p107
      %p110 = scmp.ne.s32.totalorder %s95, %s109
      %p111 = scmp.eq.s32.totalorder %s22, 0
      %p112 = por %p110, %p111
      %s114 = sadd.s32 %s113, 1
      %p117 = scmp.eq.s32.totalorder %s16, 1
      %p118 = scmp.ne.s32.totalorder %s113, %s115
      %p119 = scmp.eq.s32.totalorder %s16, 0
      %p120 = por %p118, %p119
      %p121 = scmp.ne.s32.totalorder %s113, %s115
      %p122 = scmp.eq.s32.totalorder %s21, 1
      %p123 = por %p121, %p122
      %p124 = scmp.ne.s32.totalorder %s115, %s116
      %p125 = scmp.eq.s32.totalorder %s21, 0
      %p126 = por %p124, %p125
      %p127 = scmp.ne.s32.totalorder %s115, %s116
      %p128 = scmp.eq.s32.totalorder %s22, 1
      %p129 = por %p127, %p128
      %p131 = scmp.ne.s32.totalorder %s116, %s130
      %p132 = scmp.eq.s32.totalorder %s22, 0
      %p133 = por %p131, %p132
      %s135 = sadd.s32 %s134, 1
      %p138 = scmp.eq.s32.totalorder %s16, 1
      %p139 = scmp.ne.s32.totalorder %s134, %s136
      %p140 = scmp.eq.s32.totalorder %s16, 0
      %p141 = por %p139, %p140
      %p142 = scmp.ne.s32.totalorder %s134, %s136
      %p143 = scmp.eq.s32.totalorder %s21, 1
      %p144 = por %p142, %p143
      %p145 = scmp.ne.s32.totalorder %s136, %s137
      %p146 = scmp.eq.s32.totalorder %s21, 0
      %p147 = por %p145, %p146
      %p148 = scmp.ne.s32.totalorder %s136, %s137
      %p149 = scmp.eq.s32.totalorder %s22, 1
      %p150 = por %p148, %p149
      %p152 = scmp.ne.s32.totalorder %s137, %s151
      %p153 = scmp.eq.s32.totalorder %s22, 0
      %p154 = por %p152, %p153
      %s156 = sadd.s32 %s155, 1
      %p159 = scmp.eq.s32.totalorder %s16, 1
      %p160 = scmp.ne.s32.totalorder %s155, %s157
      %p161 = scmp.eq.s32.totalorder %s16, 0
      %p162 = por %p160, %p161
      %p163 = scmp.ne.s32.totalorder %s155, %s157
      %p164 = scmp.eq.s32.totalorder %s21, 1
      %p165 = por %p163, %p164
      %p166 = scmp.ne.s32.totalorder %s157, %s158
      %p167 = scmp.eq.s32.totalorder %s21, 0
      %p168 = por %p166, %p167
      %p169 = scmp.ne.s32.totalorder %s157, %s158
      %p170 = scmp.eq.s32.totalorder %s22, 1
      %p171 = por %p169, %p170
      %p173 = scmp.ne.s32.totalorder %s158, %s172
      %p174 = scmp.eq.s32.totalorder %s22, 0
      %p175 = por %p173, %p174
      %s176 = ssub.s32 %s16, %s23
      %p177 = scmp.eq.s32.totalorder %s176, 0
      %s179 = sadd.s32 %s178, 1
      %s180 = scalar_select %p177, %s178, %s179
      %p183 = pneg %p177
      %p184 = scmp.eq.s32.totalorder %s16, 1
      %p185 = por %p183, %p184
      %p186 = scmp.ne.s32.totalorder %s178, %s181
      %p187 = scmp.eq.s32.totalorder %s16, 0
      %p188 = por %p186, %p187
      %p189 = scmp.ne.s32.totalorder %s178, %s181
      %p190 = scmp.eq.s32.totalorder %s21, 1
      %p191 = por %p189, %p190
      %p192 = scmp.ne.s32.totalorder %s181, %s182
      %p193 = scmp.eq.s32.totalorder %s21, 0
      %p194 = por %p192, %p193
      %p195 = scmp.ne.s32.totalorder %s181, %s182
      %p196 = scmp.eq.s32.totalorder %s22, 1
      %p197 = por %p195, %p196
      %p199 = scmp.ne.s32.totalorder %s182, %s198
      %p200 = scmp.eq.s32.totalorder %s22, 0
      %p201 = por %p199, %p200
      %p202 = scmp.le.s32.totalorder 1, %s16
      %p203 = scmp.lt.s32.totalorder %s16, 3
      %p204 = pnand %p202, %p203
      %p205 = pneg %p204
      // Predicated region
      $region9: #{tpu_custom_call.1} parent=5 // pred_check
        _
      $region10: #{tpu_custom_call.1} parent=5 // pred_check_branch
        %207 = sbr.rel (%p204) target = $region12
      $region11: #{tpu_custom_call.1} parent=5 // pred_region
        %s208 = ssub.s32 %s16, 1
        // Predicated region
        $region13: #{tpu_custom_call.1} parent=11 // pred_check
          %p209 = pneg %p63
        $region14: #{tpu_custom_call.1} parent=11 // pred_check_branch
          %211 = sbr.rel (%p209) target = $region16
        $region15: #{tpu_custom_call.1} parent=11 // pred_region
          _
        $region16: #{tpu_custom_call.1} parent=11 // pred_fallthru
          _
        // Predicated region
        $region17: #{tpu_custom_call.1} parent=11 // pred_check
          %p212 = pneg %p84
        $region18: #{tpu_custom_call.1} parent=11 // pred_check_branch
          %214 = sbr.rel (%p212) target = $region20
        $region19: #{tpu_custom_call.1} parent=11 // pred_region
          _
        $region20: #{tpu_custom_call.1} parent=11 // pred_fallthru
          _
        // Predicated region
        $region21: #{tpu_custom_call.1} parent=11 // pred_check
          %p215 = pneg %p105
        $region22: #{tpu_custom_call.1} parent=11 // pred_check_branch
          %217 = sbr.rel (%p215) target = $region24
        $region23: #{tpu_custom_call.1} parent=11 // pred_region
          _
        $region24: #{tpu_custom_call.1} parent=11 // pred_fallthru
          _
        // Predicated region
        $region25: #{tpu_custom_call.1} parent=11 // pred_check
          %p218 = pneg %p126
        $region26: #{tpu_custom_call.1} parent=11 // pred_check_branch
          %220 = sbr.rel (%p218) target = $region28
        $region27: #{tpu_custom_call.1} parent=11 // pred_region
          _
        $region28: #{tpu_custom_call.1} parent=11 // pred_fallthru
          _
        // Predicated region
        $region29: #{tpu_custom_call.1} parent=11 // pred_check
          %p221 = pneg %p147
        $region30: #{tpu_custom_call.1} parent=11 // pred_check_branch
          %223 = sbr.rel (%p221) target = $region32
        $region31: #{tpu_custom_call.1} parent=11 // pred_region
          _
        $region32: #{tpu_custom_call.1} parent=11 // pred_fallthru
          _
        // Predicated region
        $region33: #{tpu_custom_call.1} parent=11 // pred_check
          %p224 = pneg %p168
        $region34: #{tpu_custom_call.1} parent=11 // pred_check_branch
          %226 = sbr.rel (%p224) target = $region36
        $region35: #{tpu_custom_call.1} parent=11 // pred_region
          _
        $region36: #{tpu_custom_call.1} parent=11 // pred_fallthru
          _
      $region12: #{tpu_custom_call.1} parent=5 // pred_fallthru
        _
      %p227 = scmp.lt.s32.totalorder %s16, 2
      // Predicated region
      $region37: #{tpu_custom_call.1} parent=5 // pred_check
        %p228 = pneg %p227
      $region38: #{tpu_custom_call.1} parent=5 // pred_check_branch
        %230 = sbr.rel (%p228) target = $region40
      $region39: #{tpu_custom_call.1} parent=5 // pred_region
        // Predicated region
        $region41: #{tpu_custom_call.1} parent=39 // pred_check
          %p231 = pneg %p36
        $region42: #{tpu_custom_call.1} parent=39 // pred_check_branch
          %233 = sbr.rel (%p231) target = $region44
        $region43: #{tpu_custom_call.1} parent=39 // pred_region
          %p234 = scmp.lt.s32.totalorder %s16, 1
          %s235 = scalar_select %p234, %s16, 1
          %s236 = smul.addr %s235, 2
          %s237 = smul.addr %s236, 8
          %s238 = scalar_lea.vmem %s0, %s237
        $region44: #{tpu_custom_call.1} parent=39 // pred_fallthru
          _
      $region40: #{tpu_custom_call.1} parent=5 // pred_fallthru
        _
      %p239 = scmp.le.s32.totalorder 1, %s16
      %p240 = scmp.lt.s32.totalorder %s16, 3
      %p241 = pnand %p239, %p240
      %p242 = pneg %p241
      // Predicated region
      $region45: #{tpu_custom_call.1} parent=5 // pred_check
        _
      $region46: #{tpu_custom_call.1} parent=5 // pred_check_branch
        %244 = sbr.rel (%p241) target = $region48
      $region47: #{tpu_custom_call.1} parent=5 // pred_region
        %s245 = ssub.s32 %s16, 1
        %p246 = scmp.lt.s32.totalorder %s21, 1
        %s247 = scalar_select %p246, %s21, 1
        %s248 = smul.addr %s247, 2
        %s249 = smul.addr %s248, 8
        %s250 = scalar_lea.vmem %s0, %s249
        %p251 = pneg %p42
        %p252 = pneg %p39
        %p253 = pneg %p63
        %p254 = pneg %p60
        %p255 = pneg %p84
        %p256 = pneg %p81
        %p257 = pneg %p105
        %p258 = pneg %p102
        %p259 = pneg %p126
        %p260 = pneg %p123
        %p261 = pneg %p147
        %p262 = pneg %p144
        %p263 = pneg %p168
        %p264 = pneg %p165
        %p265 = pneg %p194
        %p266 = pneg %p191
        %s267 = sand.u32 %s181, 1
        %s268 = scalar_lea.sflag [#allocation3], %s267
        %s269 = sand.u32 %s181, 1
        %s270 = smul.addr %s269, 16
        %s271 = scalar_lea.vmem [#allocation2], %s270
        %p272 = scmp.lt.s32.totalorder %s21, 1
        %s273 = scalar_select %p272, %s21, 1
        %s274 = smul.addr %s273, 2
        %s275 = smul.addr %s274, 8
        %s276 = scalar_lea.vmem %s0, %s275
        %v277 = vld [vmem:[%s276] sm:$0xff]
        %v278 = vld [vmem:[%s276 + $0x8] sm:$0xff]
        %v279 = vld [vmem:[%s1] sm:$0x7f]
        %v280 = vld [vmem:[%s1 + $0x8] sm:$0x7f]
        %v281 = vld [vmem:[%s2] sm:$0x7f]
        %v282 = vld [vmem:[%s2 + $0x8] sm:$0x7f]
        %v283 = vld [vmem:[%s3] sm:$0xff]
        %284 = vrot.lane.b32.xlu0 %v277, 48
        %v285 = vpop.permute.xlu0 %284
        %286 = vrot.lane.b32.xlu0 %v278, 48
        %v287 = vpop.permute.xlu0 %286
        %v288 = vlaneseq
        %v289 = vand.u32 %v288, 127
        %vm290 = vcmp.lt.s32.totalorder %v289, 48
        %v291 = vsel %vm290, %v285, %v287
        %v292 = vsel %vm290, %v287, %v285
        %v293 = vlaneseq
        %v294 = vshrl.u32 %v293, 7
        %v295 = vsub.s32 0, %v294
        %v296 = vrot.slane %v279, %v295
        %v297 = vlaneseq
        %v298 = vshrl.u32 %v297, 7
        %v299 = vsub.s32 0, %v298
        %v300 = vrot.slane %v280, %v299
        %v301 = vmul.f32 %v292, %v296
        %v302 = vmul.f32 %v291, %v300
        %303 = vrot.lane.b32.xlu0 %v277, 32
        %v304 = vpop.permute.xlu0 %303
        %305 = vrot.lane.b32.xlu0 %v278, 32
        %v306 = vpop.permute.xlu0 %305
        %vm307 = vcmp.lt.s32.totalorder %v289, 32
        %v308 = vsel %vm307, %v304, %v306
        %v309 = vsel %vm307, %v306, %v304
        %v310 = vlaneseq
        %v311 = vshrl.u32 %v310, 7
        %v312 = vsub.s32 1, %v311
        %v313 = vrot.slane %v279, %v312
        %v314 = vlaneseq
        %v315 = vshrl.u32 %v314, 7
        %v316 = vsub.s32 1, %v315
        %v317 = vrot.slane %v280, %v316
        %v318 = vmul.f32 %v309, %v313
        %v319 = vmul.f32 %v308, %v317
        %320 = vrot.lane.b32.xlu0 %v277, 16
        %v321 = vpop.permute.xlu0 %320
        %322 = vrot.lane.b32.xlu0 %v278, 16
        %v323 = vpop.permute.xlu0 %322
        %vm324 = vcmp.lt.s32.totalorder %v289, 16
        %v325 = vsel %vm324, %v321, %v323
        %v326 = vsel %vm324, %v323, %v321
        %v327 = vlaneseq
        %v328 = vshrl.u32 %v327, 7
        %v329 = vsub.s32 2, %v328
        %v330 = vrot.slane %v279, %v329
        %v331 = vlaneseq
        %v332 = vshrl.u32 %v331, 7
        %v333 = vsub.s32 2, %v332
        %v334 = vrot.slane %v280, %v333
        %v335 = vmul.f32 %v326, %v330
        %v336 = vmul.f32 %v325, %v334
        %v337 = vlaneseq
        %v338 = vshrl.u32 %v337, 7
        %v339 = vsub.s32 3, %v338
        %v340 = vrot.slane %v279, %v339
        %v341 = vlaneseq
        %v342 = vshrl.u32 %v341, 7
        %v343 = vsub.s32 3, %v342
        %v344 = vrot.slane %v280, %v343
        %v345 = vmul.f32 %v277, %v340
        %v346 = vmul.f32 %v278, %v344
        %347 = vrot.lane.b32.xlu0 %v277, 112
        %v348 = vpop.permute.xlu0 %347
        %349 = vrot.lane.b32.xlu0 %v278, 112
        %v350 = vpop.permute.xlu0 %349
        %vm351 = vcmp.lt.s32.totalorder %v289, 112
        %v352 = vsel %vm351, %v348, %v350
        %v353 = vsel %vm351, %v350, %v348
        %v354 = vlaneseq
        %v355 = vshrl.u32 %v354, 7
        %v356 = vsub.s32 4, %v355
        %v357 = vrot.slane %v279, %v356
        %v358 = vlaneseq
        %v359 = vshrl.u32 %v358, 7
        %v360 = vsub.s32 4, %v359
        %v361 = vrot.slane %v280, %v360
        %v362 = vmul.f32 %v352, %v357
        %v363 = vmul.f32 %v353, %v361
        %364 = vrot.lane.b32.xlu0 %v277, 96
        %v365 = vpop.permute.xlu0 %364
        %366 = vrot.lane.b32.xlu0 %v278, 96
        %v367 = vpop.permute.xlu0 %366
        %vm368 = vcmp.lt.s32.totalorder %v289, 96
        %v369 = vsel %vm368, %v365, %v367
        %v370 = vsel %vm368, %v367, %v365
        %v371 = vlaneseq
        %v372 = vshrl.u32 %v371, 7
        %v373 = vsub.s32 5, %v372
        %v374 = vrot.slane %v279, %v373
        %v375 = vlaneseq
        %v376 = vshrl.u32 %v375, 7
        %v377 = vsub.s32 5, %v376
        %v378 = vrot.slane %v280, %v377
        %v379 = vmul.f32 %v369, %v374
        %v380 = vmul.f32 %v370, %v378
        %381 = vrot.lane.b32.xlu0 %v277, 80
        %v382 = vpop.permute.xlu0 %381
        %383 = vrot.lane.b32.xlu0 %v278, 80
        %v384 = vpop.permute.xlu0 %383
        %vm385 = vcmp.lt.s32.totalorder %v289, 80
        %v386 = vsel %vm385, %v382, %v384
        %v387 = vsel %vm385, %v384, %v382
        %v388 = vlaneseq
        %v389 = vshrl.u32 %v388, 7
        %v390 = vsub.s32 6, %v389
        %v391 = vrot.slane %v279, %v390
        %v392 = vlaneseq
        %v393 = vshrl.u32 %v392, 7
        %v394 = vsub.s32 6, %v393
        %v395 = vrot.slane %v280, %v394
        %v396 = vmul.f32 %v386, %v391
        %v397 = vmul.f32 %v387, %v395
        %399 = vset.pattern.permute.xlu0 0
        %400 = vperm.xlu0 %399, %v283
        %v401 = vpop.permute.xlu0 %400
        %v403 = vmul.f32 %v401, %v301
        %v404 = vmul.f32 %v401, %v302
        %405 = vset.pattern.permute.xlu0 7
        %406 = vperm.xlu0 %405, %v283
        %v407 = vpop.permute.xlu0 %406
        %v409 = vmul.f32 %v407, %v318
        %v410 = vmul.f32 %v407, %v319
        %v411 = vadd.f32 %v403, %v409
        %v412 = vadd.f32 %v404, %v410
        %413 = vset.pattern.permute.xlu0 14
        %414 = vperm.xlu0 %413, %v283
        %v415 = vpop.permute.xlu0 %414
        %v417 = vmul.f32 %v415, %v335
        %v418 = vmul.f32 %v415, %v336
        %v419 = vadd.f32 %v411, %v417
        %v420 = vadd.f32 %v412, %v418
        %421 = vset.pattern.permute.xlu0 21
        %422 = vperm.xlu0 %421, %v283
        %v423 = vpop.permute.xlu0 %422
        %v425 = vmul.f32 %v423, %v345
        %v426 = vmul.f32 %v423, %v346
        %v427 = vadd.f32 %v419, %v425
        %v428 = vadd.f32 %v420, %v426
        %429 = vset.pattern.permute.xlu0 28
        %430 = vperm.xlu0 %429, %v283
        %v431 = vpop.permute.xlu0 %430
        %v433 = vmul.f32 %v431, %v362
        %v434 = vmul.f32 %v431, %v363
        %v435 = vadd.f32 %v427, %v433
        %v436 = vadd.f32 %v428, %v434
        %437 = vset.pattern.permute.xlu0 35
        %438 = vperm.xlu0 %437, %v283
        %v439 = vpop.permute.xlu0 %438
        %v441 = vmul.f32 %v439, %v379
        %v442 = vmul.f32 %v439, %v380
        %v443 = vadd.f32 %v435, %v441
        %v444 = vadd.f32 %v436, %v442
        %445 = vset.pattern.permute.xlu0 42
        %446 = vperm.xlu0 %445, %v283
        %v447 = vpop.permute.xlu0 %446
        %v449 = vmul.f32 %v447, %v396
        %v450 = vmul.f32 %v447, %v397
        %v451 = vadd.f32 %v443, %v449
        %v452 = vadd.f32 %v444, %v450
        %453 = vrot.lane.b32.xlu0 %v451, 3
        %v454 = vpop.permute.xlu0 %453
        %455 = vrot.lane.b32.xlu0 %v452, 3
        %v456 = vpop.permute.xlu0 %455
        %vm457 = vcmp.lt.s32.totalorder %v289, 3
        %v458 = vsel %vm457, %v454, %v456
        %v459 = vsel %vm457, %v456, %v454
        %v460 = vlaneseq
        %v461 = vshrl.u32 %v460, 7
        %v462 = vsub.s32 0, %v461
        %v463 = vrot.slane %v281, %v462
        %v464 = vlaneseq
        %v465 = vshrl.u32 %v464, 7
        %v466 = vsub.s32 0, %v465
        %v467 = vrot.slane %v282, %v466
        %v468 = vmul.f32 %v463, %v459
        %v469 = vmul.f32 %v467, %v458
        %470 = vset.pattern.permute.xlu0 1
        %471 = vperm.xlu0 %470, %v283
        %v472 = vpop.permute.xlu0 %471
        %v474 = vmul.f32 %v472, %v301
        %v475 = vmul.f32 %v472, %v302
        %476 = vset.pattern.permute.xlu0 8
        %477 = vperm.xlu0 %476, %v283
        %v478 = vpop.permute.xlu0 %477
        %v480 = vmul.f32 %v478, %v318
        %v481 = vmul.f32 %v478, %v319
        %v482 = vadd.f32 %v474, %v480
        %v483 = vadd.f32 %v475, %v481
        %484 = vset.pattern.permute.xlu0 15
        %485 = vperm.xlu0 %484, %v283
        %v486 = vpop.permute.xlu0 %485
        %v488 = vmul.f32 %v486, %v335
        %v489 = vmul.f32 %v486, %v336
        %v490 = vadd.f32 %v482, %v488
        %v491 = vadd.f32 %v483, %v489
        %492 = vset.pattern.permute.xlu0 22
        %493 = vperm.xlu0 %492, %v283
        %v494 = vpop.permute.xlu0 %493
        %v496 = vmul.f32 %v494, %v345
        %v497 = vmul.f32 %v494, %v346
        %v498 = vadd.f32 %v490, %v496
        %v499 = vadd.f32 %v491, %v497
        %500 = vset.pattern.permute.xlu0 29
        %501 = vperm.xlu0 %500, %v283
        %v502 = vpop.permute.xlu0 %501
        %v504 = vmul.f32 %v502, %v362
        %v505 = vmul.f32 %v502, %v363
        %v506 = vadd.f32 %v498, %v504
        %v507 = vadd.f32 %v499, %v505
        %508 = vset.pattern.permute.xlu0 36
        %509 = vperm.xlu0 %508, %v283
        %v510 = vpop.permute.xlu0 %509
        %v512 = vmul.f32 %v510, %v379
        %v513 = vmul.f32 %v510, %v380
        %v514 = vadd.f32 %v506, %v512
        %v515 = vadd.f32 %v507, %v513
        %516 = vset.pattern.permute.xlu0 43
        %517 = vperm.xlu0 %516, %v283
        %v518 = vpop.permute.xlu0 %517
        %v520 = vmul.f32 %v518, %v396
        %v521 = vmul.f32 %v518, %v397
        %v522 = vadd.f32 %v514, %v520
        %v523 = vadd.f32 %v515, %v521
        %524 = vrot.lane.b32.xlu0 %v522, 2
        %v525 = vpop.permute.xlu0 %524
        %526 = vrot.lane.b32.xlu0 %v523, 2
        %v527 = vpop.permute.xlu0 %526
        %vm528 = vcmp.lt.s32.totalorder %v289, 2
        %v529 = vsel %vm528, %v525, %v527
        %v530 = vsel %vm528, %v527, %v525
        %v531 = vlaneseq
        %v532 = vshrl.u32 %v531, 7
        %v533 = vsub.s32 1, %v532
        %v534 = vrot.slane %v281, %v533
        %v535 = vlaneseq
        %v536 = vshrl.u32 %v535, 7
        %v537 = vsub.s32 1, %v536
        %v538 = vrot.slane %v282, %v537
        %v539 = vmul.f32 %v534, %v530
        %v540 = vmul.f32 %v538, %v529
        %v541 = vadd.f32 %v468, %v539
        %v542 = vadd.f32 %v469, %v540
        %543 = vset.pattern.permute.xlu0 2
        %544 = vperm.xlu0 %543, %v283
        %v545 = vpop.permute.xlu0 %544
        %v547 = vmul.f32 %v545, %v301
        %v548 = vmul.f32 %v545, %v302
        %549 = vset.pattern.permute.xlu0 9
        %550 = vperm.xlu0 %549, %v283
        %v551 = vpop.permute.xlu0 %550
        %v553 = vmul.f32 %v551, %v318
        %v554 = vmul.f32 %v551, %v319
        %v555 = vadd.f32 %v547, %v553
        %v556 = vadd.f32 %v548, %v554
        %557 = vset.pattern.permute.xlu0 16
        %558 = vperm.xlu0 %557, %v283
        %v559 = vpop.permute.xlu0 %558
        %v561 = vmul.f32 %v559, %v335
        %v562 = vmul.f32 %v559, %v336
        %v563 = vadd.f32 %v555, %v561
        %v564 = vadd.f32 %v556, %v562
        %565 = vset.pattern.permute.xlu0 23
        %566 = vperm.xlu0 %565, %v283
        %v567 = vpop.permute.xlu0 %566
        %v569 = vmul.f32 %v567, %v345
        %v570 = vmul.f32 %v567, %v346
        %v571 = vadd.f32 %v563, %v569
        %v572 = vadd.f32 %v564, %v570
        %573 = vset.pattern.permute.xlu0 30
        %574 = vperm.xlu0 %573, %v283
        %v575 = vpop.permute.xlu0 %574
        %v577 = vmul.f32 %v575, %v362
        %v578 = vmul.f32 %v575, %v363
        %v579 = vadd.f32 %v571, %v577
        %v580 = vadd.f32 %v572, %v578
        %581 = vset.pattern.permute.xlu0 37
        %582 = vperm.xlu0 %581, %v283
        %v583 = vpop.permute.xlu0 %582
        %v585 = vmul.f32 %v583, %v379
        %v586 = vmul.f32 %v583, %v380
        %v587 = vadd.f32 %v579, %v585
        %v588 = vadd.f32 %v580, %v586
        %589 = vset.pattern.permute.xlu0 44
        %590 = vperm.xlu0 %589, %v283
        %v591 = vpop.permute.xlu0 %590
        %v593 = vmul.f32 %v591, %v396
        %v594 = vmul.f32 %v591, %v397
        %v595 = vadd.f32 %v587, %v593
        %v596 = vadd.f32 %v588, %v594
        %597 = vrot.lane.b32.xlu0 %v595, 1
        %v598 = vpop.permute.xlu0 %597
        %599 = vrot.lane.b32.xlu0 %v596, 1
        %v600 = vpop.permute.xlu0 %599
        %vm601 = vcmp.lt.s32.totalorder %v289, 1
        %v602 = vsel %vm601, %v598, %v600
        %v603 = vsel %vm601, %v600, %v598
        %v604 = vlaneseq
        %v605 = vshrl.u32 %v604, 7
        %v606 = vsub.s32 2, %v605
        %v607 = vrot.slane %v281, %v606
        %v608 = vlaneseq
        %v609 = vshrl.u32 %v608, 7
        %v610 = vsub.s32 2, %v609
        %v611 = vrot.slane %v282, %v610
        %v612 = vmul.f32 %v607, %v603
        %v613 = vmul.f32 %v611, %v602
        %v614 = vadd.f32 %v541, %v612
        %v615 = vadd.f32 %v542, %v613
        %616 = vset.pattern.permute.xlu0 3
        %617 = vperm.xlu0 %616, %v283
        %v618 = vpop.permute.xlu0 %617
        %v620 = vmul.f32 %v618, %v301
        %v621 = vmul.f32 %v618, %v302
        %622 = vset.pattern.permute.xlu0 10
        %623 = vperm.xlu0 %622, %v283
        %v624 = vpop.permute.xlu0 %623
        %v626 = vmul.f32 %v624, %v318
        %v627 = vmul.f32 %v624, %v319
        %v628 = vadd.f32 %v620, %v626
        %v629 = vadd.f32 %v621, %v627
        %630 = vset.pattern.permute.xlu0 17
        %631 = vperm.xlu0 %630, %v283
        %v632 = vpop.permute.xlu0 %631
        %v634 = vmul.f32 %v632, %v335
        %v635 = vmul.f32 %v632, %v336
        %v636 = vadd.f32 %v628, %v634
        %v637 = vadd.f32 %v629, %v635
        %638 = vset.pattern.permute.xlu0 24
        %639 = vperm.xlu0 %638, %v283
        %v640 = vpop.permute.xlu0 %639
        %v642 = vmul.f32 %v640, %v345
        %v643 = vmul.f32 %v640, %v346
        %v644 = vadd.f32 %v636, %v642
        %v645 = vadd.f32 %v637, %v643
        %646 = vset.pattern.permute.xlu0 31
        %647 = vperm.xlu0 %646, %v283
        %v648 = vpop.permute.xlu0 %647
        %v650 = vmul.f32 %v648, %v362
        %v651 = vmul.f32 %v648, %v363
        %v652 = vadd.f32 %v644, %v650
        %v653 = vadd.f32 %v645, %v651
        %654 = vset.pattern.permute.xlu0 38
        %655 = vperm.xlu0 %654, %v283
        %v656 = vpop.permute.xlu0 %655
        %v658 = vmul.f32 %v656, %v379
        %v659 = vmul.f32 %v656, %v380
        %v660 = vadd.f32 %v652, %v658
        %v661 = vadd.f32 %v653, %v659
        %662 = vset.pattern.permute.xlu0 45
        %663 = vperm.xlu0 %662, %v283
        %v664 = vpop.permute.xlu0 %663
        %v666 = vmul.f32 %v664, %v396
        %v667 = vmul.f32 %v664, %v397
        %v668 = vadd.f32 %v660, %v666
        %v669 = vadd.f32 %v661, %v667
        %v670 = vlaneseq
        %v671 = vshrl.u32 %v670, 7
        %v672 = vsub.s32 3, %v671
        %v673 = vrot.slane %v281, %v672
        %v674 = vlaneseq
        %v675 = vshrl.u32 %v674, 7
        %v676 = vsub.s32 3, %v675
        %v677 = vrot.slane %v282, %v676
        %v678 = vmul.f32 %v673, %v668
        %v679 = vmul.f32 %v677, %v669
        %v680 = vadd.f32 %v614, %v678
        %v681 = vadd.f32 %v615, %v679
        %682 = vset.pattern.permute.xlu0 4
        %683 = vperm.xlu0 %682, %v283
        %v684 = vpop.permute.xlu0 %683
        %v686 = vmul.f32 %v684, %v301
        %v687 = vmul.f32 %v684, %v302
        %688 = vset.pattern.permute.xlu0 11
        %689 = vperm.xlu0 %688, %v283
        %v690 = vpop.permute.xlu0 %689
        %v692 = vmul.f32 %v690, %v318
        %v693 = vmul.f32 %v690, %v319
        %v694 = vadd.f32 %v686, %v692
        %v695 = vadd.f32 %v687, %v693
        %696 = vset.pattern.permute.xlu0 18
        %697 = vperm.xlu0 %696, %v283
        %v698 = vpop.permute.xlu0 %697
        %v700 = vmul.f32 %v698, %v335
        %v701 = vmul.f32 %v698, %v336
        %v702 = vadd.f32 %v694, %v700
        %v703 = vadd.f32 %v695, %v701
        %704 = vset.pattern.permute.xlu0 25
        %705 = vperm.xlu0 %704, %v283
        %v706 = vpop.permute.xlu0 %705
        %v708 = vmul.f32 %v706, %v345
        %v709 = vmul.f32 %v706, %v346
        %v710 = vadd.f32 %v702, %v708
        %v711 = vadd.f32 %v703, %v709
        %712 = vset.pattern.permute.xlu0 32
        %713 = vperm.xlu0 %712, %v283
        %v714 = vpop.permute.xlu0 %713
        %v716 = vmul.f32 %v714, %v362
        %v717 = vmul.f32 %v714, %v363
        %v718 = vadd.f32 %v710, %v716
        %v719 = vadd.f32 %v711, %v717
        %720 = vset.pattern.permute.xlu0 39
        %721 = vperm.xlu0 %720, %v283
        %v722 = vpop.permute.xlu0 %721
        %v724 = vmul.f32 %v722, %v379
        %v725 = vmul.f32 %v722, %v380
        %v726 = vadd.f32 %v718, %v724
        %v727 = vadd.f32 %v719, %v725
        %728 = vset.pattern.permute.xlu0 46
        %729 = vperm.xlu0 %728, %v283
        %v730 = vpop.permute.xlu0 %729
        %v732 = vmul.f32 %v730, %v396
        %v733 = vmul.f32 %v730, %v397
        %v734 = vadd.f32 %v726, %v732
        %v735 = vadd.f32 %v727, %v733
        %736 = vrot.lane.b32.xlu0 %v734, 127
        %v737 = vpop.permute.xlu0 %736
        %738 = vrot.lane.b32.xlu0 %v735, 127
        %v739 = vpop.permute.xlu0 %738
        %vm740 = vcmp.lt.s32.totalorder %v289, 127
        %v741 = vsel %vm740, %v737, %v739
        %v742 = vsel %vm740, %v739, %v737
        %v743 = vlaneseq
        %v744 = vshrl.u32 %v743, 7
        %v745 = vsub.s32 4, %v744
        %v746 = vrot.slane %v281, %v745
        %v747 = vlaneseq
        %v748 = vshrl.u32 %v747, 7
        %v749 = vsub.s32 4, %v748
        %v750 = vrot.slane %v282, %v749
        %v751 = vmul.f32 %v746, %v741
        %v752 = vmul.f32 %v750, %v742
        %v753 = vadd.f32 %v680, %v751
        %v754 = vadd.f32 %v681, %v752
        %755 = vset.pattern.permute.xlu0 5
        %756 = vperm.xlu0 %755, %v283
        %v757 = vpop.permute.xlu0 %756
        %v759 = vmul.f32 %v757, %v301
        %v760 = vmul.f32 %v757, %v302
        %761 = vset.pattern.permute.xlu0 12
        %762 = vperm.xlu0 %761, %v283
        %v763 = vpop.permute.xlu0 %762
        %v765 = vmul.f32 %v763, %v318
        %v766 = vmul.f32 %v763, %v319
        %v767 = vadd.f32 %v759, %v765
        %v768 = vadd.f32 %v760, %v766
        %769 = vset.pattern.permute.xlu0 19
        %770 = vperm.xlu0 %769, %v283
        %v771 = vpop.permute.xlu0 %770
        %v773 = vmul.f32 %v771, %v335
        %v774 = vmul.f32 %v771, %v336
        %v775 = vadd.f32 %v767, %v773
        %v776 = vadd.f32 %v768, %v774
        %777 = vset.pattern.permute.xlu0 26
        %778 = vperm.xlu0 %777, %v283
        %v779 = vpop.permute.xlu0 %778
        %v781 = vmul.f32 %v779, %v345
        %v782 = vmul.f32 %v779, %v346
        %v783 = vadd.f32 %v775, %v781
        %v784 = vadd.f32 %v776, %v782
        %785 = vset.pattern.permute.xlu0 33
        %786 = vperm.xlu0 %785, %v283
        %v787 = vpop.permute.xlu0 %786
        %v789 = vmul.f32 %v787, %v362
        %v790 = vmul.f32 %v787, %v363
        %v791 = vadd.f32 %v783, %v789
        %v792 = vadd.f32 %v784, %v790
        %793 = vset.pattern.permute.xlu0 40
        %794 = vperm.xlu0 %793, %v283
        %v795 = vpop.permute.xlu0 %794
        %v797 = vmul.f32 %v795, %v379
        %v798 = vmul.f32 %v795, %v380
        %v799 = vadd.f32 %v791, %v797
        %v800 = vadd.f32 %v792, %v798
        %801 = vset.pattern.permute.xlu0 47
        %802 = vperm.xlu0 %801, %v283
        %v803 = vpop.permute.xlu0 %802
        %v805 = vmul.f32 %v803, %v396
        %v806 = vmul.f32 %v803, %v397
        %v807 = vadd.f32 %v799, %v805
        %v808 = vadd.f32 %v800, %v806
        %809 = vrot.lane.b32.xlu0 %v807, 126
        %v810 = vpop.permute.xlu0 %809
        %811 = vrot.lane.b32.xlu0 %v808, 126
        %v812 = vpop.permute.xlu0 %811
        %vm813 = vcmp.lt.s32.totalorder %v289, 126
        %v814 = vsel %vm813, %v810, %v812
        %v815 = vsel %vm813, %v812, %v810
        %v816 = vlaneseq
        %v817 = vshrl.u32 %v816, 7
        %v818 = vsub.s32 5, %v817
        %v819 = vrot.slane %v281, %v818
        %v820 = vlaneseq
        %v821 = vshrl.u32 %v820, 7
        %v822 = vsub.s32 5, %v821
        %v823 = vrot.slane %v282, %v822
        %v824 = vmul.f32 %v819, %v814
        %v825 = vmul.f32 %v823, %v815
        %v826 = vadd.f32 %v753, %v824
        %v827 = vadd.f32 %v754, %v825
        %828 = vset.pattern.permute.xlu0 6
        %829 = vperm.xlu0 %828, %v283
        %v830 = vpop.permute.xlu0 %829
        %v832 = vmul.f32 %v830, %v301
        %v833 = vmul.f32 %v830, %v302
        %834 = vset.pattern.permute.xlu0 13
        %835 = vperm.xlu0 %834, %v283
        %v836 = vpop.permute.xlu0 %835
        %v838 = vmul.f32 %v836, %v318
        %v839 = vmul.f32 %v836, %v319
        %v840 = vadd.f32 %v832, %v838
        %v841 = vadd.f32 %v833, %v839
        %842 = vset.pattern.permute.xlu0 20
        %843 = vperm.xlu0 %842, %v283
        %v844 = vpop.permute.xlu0 %843
        %v846 = vmul.f32 %v844, %v335
        %v847 = vmul.f32 %v844, %v336
        %v848 = vadd.f32 %v840, %v846
        %v849 = vadd.f32 %v841, %v847
        %850 = vset.pattern.permute.xlu0 27
        %851 = vperm.xlu0 %850, %v283
        %v852 = vpop.permute.xlu0 %851
        %v854 = vmul.f32 %v852, %v345
        %v855 = vmul.f32 %v852, %v346
        %v856 = vadd.f32 %v848, %v854
        %v857 = vadd.f32 %v849, %v855
        %858 = vset.pattern.permute.xlu0 34
        %859 = vperm.xlu0 %858, %v283
        %v860 = vpop.permute.xlu0 %859
        %v862 = vmul.f32 %v860, %v362
        %v863 = vmul.f32 %v860, %v363
        %v864 = vadd.f32 %v856, %v862
        %v865 = vadd.f32 %v857, %v863
        %866 = vset.pattern.permute.xlu0 41
        %867 = vperm.xlu0 %866, %v283
        %v868 = vpop.permute.xlu0 %867
        %v870 = vmul.f32 %v868, %v379
        %v871 = vmul.f32 %v868, %v380
        %v872 = vadd.f32 %v864, %v870
        %v873 = vadd.f32 %v865, %v871
        %874 = vset.pattern.permute.xlu0 48
        %875 = vperm.xlu0 %874, %v283
        %v876 = vpop.permute.xlu0 %875
        %v878 = vmul.f32 %v876, %v396
        %v879 = vmul.f32 %v876, %v397
        %v880 = vadd.f32 %v872, %v878
        %v881 = vadd.f32 %v873, %v879
        %882 = vrot.lane.b32.xlu0 %v880, 125
        %v883 = vpop.permute.xlu0 %882
        %884 = vrot.lane.b32.xlu0 %v881, 125
        %v885 = vpop.permute.xlu0 %884
        %vm886 = vcmp.lt.s32.totalorder %v289, 125
        %v887 = vsel %vm886, %v883, %v885
        %v888 = vsel %vm886, %v885, %v883
        %v889 = vlaneseq
        %v890 = vshrl.u32 %v889, 7
        %v891 = vsub.s32 6, %v890
        %v892 = vrot.slane %v281, %v891
        %v893 = vlaneseq
        %v894 = vshrl.u32 %v893, 7
        %v895 = vsub.s32 6, %v894
        %v896 = vrot.slane %v282, %v895
        %v897 = vmul.f32 %v892, %v887
        %v898 = vmul.f32 %v896, %v888
        %v899 = vadd.f32 %v826, %v897
        %v900 = vadd.f32 %v827, %v898
        %901 = vset.pattern.permute.xlu0 58
        %902 = vperm.xlu0 %901, %v283
        %v903 = vpop.permute.xlu0 %902
        %v905 = vadd.f32 %v899, %v903
        %v906 = vadd.f32 %v900, %v903
        %v907 = vld [vmem:[%s4] sm:$0xff]
        %v908 = vld [vmem:[%s5] sm:$0xff]
        %vm909 = vcmask 64512
        %v911 = vsel %vm909, %v908, 0
        %913 = vmatprep.subr.mxu0 %v906
        %914 = vmatpush1.msra.mxu0 %v905
        %915 = vmatprep.subr.mxu0 0.0
        %916 = vmatpush1.msra.mxu0 0.0
        %917 = vmatprep.subr.mxu0 0.0
        %918 = vmatpush1.msra.mxu0 0.0
        %919 = vmatprep.subr.mxu0 0.0
        %920 = vmatpush1.msra.mxu0 0.0
        %921 = vmatprep.subr.mxu0 0.0
        %922 = vmatpush1.msra.mxu0 0.0
        %923 = vmatprep.subr.mxu0 0.0
        %924 = vmatpush1.msra.mxu0 0.0
        %925 = vmatprep.subr.mxu0 0.0
        %926 = vmatpush1.msra.mxu0 0.0
        %927 = vmatprep.subr.mxu0 0.0
        %928 = vmatpush1.msra.mxu0 0.0
        %929 = vmatprep.subr.mxu0 0.0
        %930 = vmatpush1.msra.mxu0 0.0
        %931 = vmatprep.subr.mxu0 0.0
        %932 = vmatpush1.msra.mxu0 0.0
        %933 = vmatprep.subr.mxu0 0.0
        %934 = vmatpush1.msra.mxu0 0.0
        %935 = vmatprep.subr.mxu0 0.0
        %936 = vmatpush1.msra.mxu0 0.0
        %937 = vmatprep.subr.mxu0 0.0
        %938 = vmatpush1.msra.mxu0 0.0
        %939 = vmatprep.subr.mxu0 0.0
        %940 = vmatpush1.msra.mxu0 0.0
        %941 = vmatprep.subr.mxu0 0.0
        %942 = vmatpush1.msra.mxu0 0.0
        %943 = vmatprep.subr.mxu0 0.0
        %944 = vmatpush1.msra.mxu0 0.0
        %945 = vmatprep.subr.mxu0 0.0
        %946 = vmatpush1.msra.mxu0 0.0
        %947 = vmatprep.subr.mxu0 0.0
        %948 = vmatpush1.msra.mxu0 0.0
        %949 = vmatprep.subr.mxu0 0.0
        %950 = vmatpush1.msra.mxu0 0.0
        %951 = vmatprep.subr.mxu0 0.0
        %952 = vmatpush1.msra.mxu0 0.0
        %953 = vmatprep.subr.mxu0 0.0
        %954 = vmatpush1.msra.mxu0 0.0
        %955 = vmatprep.subr.mxu0 0.0
        %956 = vmatpush1.msra.mxu0 0.0
        %957 = vmatprep.subr.mxu0 0.0
        %958 = vmatpush1.msra.mxu0 0.0
        %959 = vmatprep.subr.mxu0 0.0
        %960 = vmatpush1.msra.mxu0 0.0
        %961 = vmatprep.subr.mxu0 0.0
        %962 = vmatpush1.msra.mxu0 0.0
        %963 = vmatprep.subr.mxu0 0.0
        %964 = vmatpush1.msra.mxu0 0.0
        %965 = vmatprep.subr.mxu0 0.0
        %966 = vmatpush1.msra.mxu0 0.0
        %967 = vmatprep.subr.mxu0 0.0
        %968 = vmatpush1.msra.mxu0 0.0
        %969 = vmatprep.subr.mxu0 0.0
        %970 = vmatpush1.msra.mxu0 0.0
        %971 = vmatprep.subr.mxu0 0.0
        %972 = vmatpush1.msra.mxu0 0.0
        %973 = vmatprep.subr.mxu0 0.0
        %974 = vmatpush1.msra.mxu0 0.0
        %975 = vmatprep.subr.mxu0 0.0
        %976 = vmatpush1.msra.mxu0 0.0
        %977 = vmatprep.mubr.f32.mxu0 0.0
        %978 = vmatmul.mubr.f32.gmra.mrb[0].mxu0 %v911
        %v979 = vpop.f32.mrb[0].mxu0
        %v980 = vadd.f32 0.0, %v979
        %v981 = vpop.f32.mrb[0].mxu0
        %v982 = vadd.f32 0.0, %v981
        %983 = vdwg.mxu0
        %v985 = vsel %vm909, %v907, 0
        %987 = vmatprep.subr.mxu0 %v278
        %988 = vmatpush1.msra.mxu0 %v277
        %989 = vmatprep.subr.mxu0 0.0
        %990 = vmatpush1.msra.mxu0 0.0
        %991 = vmatprep.subr.mxu0 0.0
        %992 = vmatpush1.msra.mxu0 0.0
        %993 = vmatprep.subr.mxu0 0.0
        %994 = vmatpush1.msra.mxu0 0.0
        %995 = vmatprep.subr.mxu0 0.0
        %996 = vmatpush1.msra.mxu0 0.0
        %997 = vmatprep.subr.mxu0 0.0
        %998 = vmatpush1.msra.mxu0 0.0
        %999 = vmatprep.subr.mxu0 0.0
        %1000 = vmatpush1.msra.mxu0 0.0
        %1001 = vmatprep.subr.mxu0 0.0
        %1002 = vmatpush1.msra.mxu0 0.0
        %1003 = vmatprep.subr.mxu0 0.0
        %1004 = vmatpush1.msra.mxu0 0.0
        %1005 = vmatprep.subr.mxu0 0.0
        %1006 = vmatpush1.msra.mxu0 0.0
        %1007 = vmatprep.subr.mxu0 0.0
        %1008 = vmatpush1.msra.mxu0 0.0
        %1009 = vmatprep.subr.mxu0 0.0
        %1010 = vmatpush1.msra.mxu0 0.0
        %1011 = vmatprep.subr.mxu0 0.0
        %1012 = vmatpush1.msra.mxu0 0.0
        %1013 = vmatprep.subr.mxu0 0.0
        %1014 = vmatpush1.msra.mxu0 0.0
        %1015 = vmatprep.subr.mxu0 0.0
        %1016 = vmatpush1.msra.mxu0 0.0
        %1017 = vmatprep.subr.mxu0 0.0
        %1018 = vmatpush1.msra.mxu0 0.0
        %1019 = vmatprep.subr.mxu0 0.0
        %1020 = vmatpush1.msra.mxu0 0.0
        %1021 = vmatprep.subr.mxu0 0.0
        %1022 = vmatpush1.msra.mxu0 0.0
        %1023 = vmatprep.subr.mxu0 0.0
        %1024 = vmatpush1.msra.mxu0 0.0
        %1025 = vmatprep.subr.mxu0 0.0
        %1026 = vmatpush1.msra.mxu0 0.0
        %1027 = vmatprep.subr.mxu0 0.0
        %1028 = vmatpush1.msra.mxu0 0.0
        %1029 = vmatprep.subr.mxu0 0.0
        %1030 = vmatpush1.msra.mxu0 0.0
        %1031 = vmatprep.subr.mxu0 0.0
        %1032 = vmatpush1.msra.mxu0 0.0
        %1033 = vmatprep.subr.mxu0 0.0
        %1034 = vmatpush1.msra.mxu0 0.0
        %1035 = vmatprep.subr.mxu0 0.0
        %1036 = vmatpush1.msra.mxu0 0.0
        %1037 = vmatprep.subr.mxu0 0.0
        %1038 = vmatpush1.msra.mxu0 0.0
        %1039 = vmatprep.subr.mxu0 0.0
        %1040 = vmatpush1.msra.mxu0 0.0
        %1041 = vmatprep.subr.mxu0 0.0
        %1042 = vmatpush1.msra.mxu0 0.0
        %1043 = vmatprep.subr.mxu0 0.0
        %1044 = vmatpush1.msra.mxu0 0.0
        %1045 = vmatprep.subr.mxu0 0.0
        %1046 = vmatpush1.msra.mxu0 0.0
        %1047 = vmatprep.subr.mxu0 0.0
        %1048 = vmatpush1.msra.mxu0 0.0
        %1049 = vmatprep.subr.mxu0 0.0
        %1050 = vmatpush1.msra.mxu0 0.0
        %1051 = vmatprep.mubr.f32.mxu0 0.0
        %1052 = vmatmul.mubr.f32.gmra.mrb[0].mxu0 %v985
        %v1053 = vpop.f32.mrb[0].mxu0
        %v1054 = vadd.f32 %v980, %v1053
        %v1055 = vpop.f32.mrb[0].mxu0
        %v1056 = vadd.f32 %v982, %v1055
        %1057 = vdwg.mxu0
        %1058 = vset.pattern.permute.xlu0 60
        %1059 = vperm.xlu0 %1058, %v283
        %v1060 = vpop.permute.xlu0 %1059
        %v1062 = vadd.f32 %v1054, %v1060
        %v1063 = vadd.f32 %v1056, %v1060
        %v1064 = vmax.f32 %v1062, 0.0
        %v1065 = vmax.f32 %v1063, 0.0
        %1066 = vrot.lane.b32.xlu0 %v1064, 16
        %v1067 = vpop.permute.xlu0 %1066
        %1068 = vrot.lane.b32.xlu0 %v1065, 16
        %v1069 = vpop.permute.xlu0 %1068
        %v1070 = vsel %vm324, %v1067, %v1069
        %v1071 = vsel %vm324, %v1069, %v1067
        %v1072 = vmul.f32 %v1071, %v330
        %v1073 = vmul.f32 %v1070, %v334
        %v1074 = vmul.f32 %v1064, %v340
        %v1075 = vmul.f32 %v1065, %v344
        %1076 = vrot.lane.b32.xlu0 %v1064, 112
        %v1077 = vpop.permute.xlu0 %1076
        %1078 = vrot.lane.b32.xlu0 %v1065, 112
        %v1079 = vpop.permute.xlu0 %1078
        %v1080 = vsel %vm351, %v1077, %v1079
        %v1081 = vsel %vm351, %v1079, %v1077
        %v1082 = vmul.f32 %v1080, %v357
        %v1083 = vmul.f32 %v1081, %v361
        %v1084 = vld [vmem:[%s6] sm:$0xff]
        %s1085 = scalar_lea.vmem %s6, 24
        %v1086 = vld [vmem:[%s1085] sm:$0xff]
        %v1088 = vsel %vm909, %v1086, 0
        %1090 = vmatprep.subr.mxu0 %v1075
        %1091 = vmatpush1.msra.mxu0 %v1074
        %1092 = vmatprep.subr.mxu0 0.0
        %1093 = vmatpush1.msra.mxu0 0.0
        %1094 = vmatprep.subr.mxu0 0.0
        %1095 = vmatpush1.msra.mxu0 0.0
        %1096 = vmatprep.subr.mxu0 0.0
        %1097 = vmatpush1.msra.mxu0 0.0
        %1098 = vmatprep.subr.mxu0 0.0
        %1099 = vmatpush1.msra.mxu0 0.0
        %1100 = vmatprep.subr.mxu0 0.0
        %1101 = vmatpush1.msra.mxu0 0.0
        %1102 = vmatprep.subr.mxu0 0.0
        %1103 = vmatpush1.msra.mxu0 0.0
        %1104 = vmatprep.subr.mxu0 0.0
        %1105 = vmatpush1.msra.mxu0 0.0
        %1106 = vmatprep.subr.mxu0 0.0
        %1107 = vmatpush1.msra.mxu0 0.0
        %1108 = vmatprep.subr.mxu0 0.0
        %1109 = vmatpush1.msra.mxu0 0.0
        %1110 = vmatprep.subr.mxu0 0.0
        %1111 = vmatpush1.msra.mxu0 0.0
        %1112 = vmatprep.subr.mxu0 0.0
        %1113 = vmatpush1.msra.mxu0 0.0
        %1114 = vmatprep.subr.mxu0 0.0
        %1115 = vmatpush1.msra.mxu0 0.0
        %1116 = vmatprep.subr.mxu0 0.0
        %1117 = vmatpush1.msra.mxu0 0.0
        %1118 = vmatprep.subr.mxu0 0.0
        %1119 = vmatpush1.msra.mxu0 0.0
        %1120 = vmatprep.subr.mxu0 0.0
        %1121 = vmatpush1.msra.mxu0 0.0
        %1122 = vmatprep.subr.mxu0 0.0
        %1123 = vmatpush1.msra.mxu0 0.0
        %1124 = vmatprep.subr.mxu0 0.0
        %1125 = vmatpush1.msra.mxu0 0.0
        %1126 = vmatprep.subr.mxu0 0.0
        %1127 = vmatpush1.msra.mxu0 0.0
        %1128 = vmatprep.subr.mxu0 0.0
        %1129 = vmatpush1.msra.mxu0 0.0
        %1130 = vmatprep.subr.mxu0 0.0
        %1131 = vmatpush1.msra.mxu0 0.0
        %1132 = vmatprep.subr.mxu0 0.0
        %1133 = vmatpush1.msra.mxu0 0.0
        %1134 = vmatprep.subr.mxu0 0.0
        %1135 = vmatpush1.msra.mxu0 0.0
        %1136 = vmatprep.subr.mxu0 0.0
        %1137 = vmatpush1.msra.mxu0 0.0
        %1138 = vmatprep.subr.mxu0 0.0
        %1139 = vmatpush1.msra.mxu0 0.0
        %1140 = vmatprep.subr.mxu0 0.0
        %1141 = vmatpush1.msra.mxu0 0.0
        %1142 = vmatprep.subr.mxu0 0.0
        %1143 = vmatpush1.msra.mxu0 0.0
        %1144 = vmatprep.subr.mxu0 0.0
        %1145 = vmatpush1.msra.mxu0 0.0
        %1146 = vmatprep.subr.mxu0 0.0
        %1147 = vmatpush1.msra.mxu0 0.0
        %1148 = vmatprep.subr.mxu0 0.0
        %1149 = vmatpush1.msra.mxu0 0.0
        %1150 = vmatprep.subr.mxu0 0.0
        %1151 = vmatpush1.msra.mxu0 0.0
        %1152 = vmatprep.subr.mxu0 0.0
        %1153 = vmatpush1.msra.mxu0 0.0
        %1154 = vmatprep.mubr.f32.mxu0 0.0
        %1155 = vmatmul.mubr.f32.gmra.mrb[0].mxu0 %v1088
        %v1156 = vpop.f32.mrb[0].mxu0
        %v1157 = vadd.f32 0.0, %v1156
        %v1158 = vpop.f32.mrb[0].mxu0
        %v1159 = vadd.f32 0.0, %v1158
        %1160 = vdwg.mxu0
        %v1162 = vsel %vm909, %v1084, 0
        %1164 = vmatprep.subr.mxu0 %v1073
        %1165 = vmatpush1.msra.mxu0 %v1072
        %1166 = vmatprep.subr.mxu0 0.0
        %1167 = vmatpush1.msra.mxu0 0.0
        %1168 = vmatprep.subr.mxu0 0.0
        %1169 = vmatpush1.msra.mxu0 0.0
        %1170 = vmatprep.subr.mxu0 0.0
        %1171 = vmatpush1.msra.mxu0 0.0
        %1172 = vmatprep.subr.mxu0 0.0
        %1173 = vmatpush1.msra.mxu0 0.0
        %1174 = vmatprep.subr.mxu0 0.0
        %1175 = vmatpush1.msra.mxu0 0.0
        %1176 = vmatprep.subr.mxu0 0.0
        %1177 = vmatpush1.msra.mxu0 0.0
        %1178 = vmatprep.subr.mxu0 0.0
        %1179 = vmatpush1.msra.mxu0 0.0
        %1180 = vmatprep.subr.mxu0 0.0
        %1181 = vmatpush1.msra.mxu0 0.0
        %1182 = vmatprep.subr.mxu0 0.0
        %1183 = vmatpush1.msra.mxu0 0.0
        %1184 = vmatprep.subr.mxu0 0.0
        %1185 = vmatpush1.msra.mxu0 0.0
        %1186 = vmatprep.subr.mxu0 0.0
        %1187 = vmatpush1.msra.mxu0 0.0
        %1188 = vmatprep.subr.mxu0 0.0
        %1189 = vmatpush1.msra.mxu0 0.0
        %1190 = vmatprep.subr.mxu0 0.0
        %1191 = vmatpush1.msra.mxu0 0.0
        %1192 = vmatprep.subr.mxu0 0.0
        %1193 = vmatpush1.msra.mxu0 0.0
        %1194 = vmatprep.subr.mxu0 0.0
        %1195 = vmatpush1.msra.mxu0 0.0
        %1196 = vmatprep.subr.mxu0 0.0
        %1197 = vmatpush1.msra.mxu0 0.0
        %1198 = vmatprep.subr.mxu0 0.0
        %1199 = vmatpush1.msra.mxu0 0.0
        %1200 = vmatprep.subr.mxu0 0.0
        %1201 = vmatpush1.msra.mxu0 0.0
        %1202 = vmatprep.subr.mxu0 0.0
        %1203 = vmatpush1.msra.mxu0 0.0
        %1204 = vmatprep.subr.mxu0 0.0
        %1205 = vmatpush1.msra.mxu0 0.0
        %1206 = vmatprep.subr.mxu0 0.0
        %1207 = vmatpush1.msra.mxu0 0.0
        %1208 = vmatprep.subr.mxu0 0.0
        %1209 = vmatpush1.msra.mxu0 0.0
        %1210 = vmatprep.subr.mxu0 0.0
        %1211 = vmatpush1.msra.mxu0 0.0
        %1212 = vmatprep.subr.mxu0 0.0
        %1213 = vmatpush1.msra.mxu0 0.0
        %1214 = vmatprep.subr.mxu0 0.0
        %1215 = vmatpush1.msra.mxu0 0.0
        %1216 = vmatprep.subr.mxu0 0.0
        %1217 = vmatpush1.msra.mxu0 0.0
        %1218 = vmatprep.subr.mxu0 0.0
        %1219 = vmatpush1.msra.mxu0 0.0
        %1220 = vmatprep.subr.mxu0 0.0
        %1221 = vmatpush1.msra.mxu0 0.0
        %1222 = vmatprep.subr.mxu0 0.0
        %1223 = vmatpush1.msra.mxu0 0.0
        %1224 = vmatprep.subr.mxu0 0.0
        %1225 = vmatpush1.msra.mxu0 0.0
        %1226 = vmatprep.subr.mxu0 0.0
        %1227 = vmatpush1.msra.mxu0 0.0
        %1228 = vmatprep.mubr.f32.mxu0 0.0
        %1229 = vmatmul.mubr.f32.gmra.mrb[0].mxu0 %v1162
        %v1230 = vpop.f32.mrb[0].mxu0
        %v1231 = vadd.f32 %v1157, %v1230
        %v1232 = vpop.f32.mrb[0].mxu0
        %v1233 = vadd.f32 %v1159, %v1232
        %1234 = vdwg.mxu0
        %s1235 = scalar_lea.vmem %s6, 48
        %v1236 = vld [vmem:[%s1235] sm:$0xff]
        %v1238 = vsel %vm909, %v1236, 0
        %1240 = vmatprep.subr.mxu0 %v1083
        %1241 = vmatpush1.msra.mxu0 %v1082
        %1242 = vmatprep.subr.mxu0 0.0
        %1243 = vmatpush1.msra.mxu0 0.0
        %1244 = vmatprep.subr.mxu0 0.0
        %1245 = vmatpush1.msra.mxu0 0.0
        %1246 = vmatprep.subr.mxu0 0.0
        %1247 = vmatpush1.msra.mxu0 0.0
        %1248 = vmatprep.subr.mxu0 0.0
        %1249 = vmatpush1.msra.mxu0 0.0
        %1250 = vmatprep.subr.mxu0 0.0
        %1251 = vmatpush1.msra.mxu0 0.0
        %1252 = vmatprep.subr.mxu0 0.0
        %1253 = vmatpush1.msra.mxu0 0.0
        %1254 = vmatprep.subr.mxu0 0.0
        %1255 = vmatpush1.msra.mxu0 0.0
        %1256 = vmatprep.subr.mxu0 0.0
        %1257 = vmatpush1.msra.mxu0 0.0
        %1258 = vmatprep.subr.mxu0 0.0
        %1259 = vmatpush1.msra.mxu0 0.0
        %1260 = vmatprep.subr.mxu0 0.0
        %1261 = vmatpush1.msra.mxu0 0.0
        %1262 = vmatprep.subr.mxu0 0.0
        %1263 = vmatpush1.msra.mxu0 0.0
        %1264 = vmatprep.subr.mxu0 0.0
        %1265 = vmatpush1.msra.mxu0 0.0
        %1266 = vmatprep.subr.mxu0 0.0
        %1267 = vmatpush1.msra.mxu0 0.0
        %1268 = vmatprep.subr.mxu0 0.0
        %1269 = vmatpush1.msra.mxu0 0.0
        %1270 = vmatprep.subr.mxu0 0.0
        %1271 = vmatpush1.msra.mxu0 0.0
        %1272 = vmatprep.subr.mxu0 0.0
        %1273 = vmatpush1.msra.mxu0 0.0
        %1274 = vmatprep.subr.mxu0 0.0
        %1275 = vmatpush1.msra.mxu0 0.0
        %1276 = vmatprep.subr.mxu0 0.0
        %1277 = vmatpush1.msra.mxu0 0.0
        %1278 = vmatprep.subr.mxu0 0.0
        %1279 = vmatpush1.msra.mxu0 0.0
        %1280 = vmatprep.subr.mxu0 0.0
        %1281 = vmatpush1.msra.mxu0 0.0
        %1282 = vmatprep.subr.mxu0 0.0
        %1283 = vmatpush1.msra.mxu0 0.0
        %1284 = vmatprep.subr.mxu0 0.0
        %1285 = vmatpush1.msra.mxu0 0.0
        %1286 = vmatprep.subr.mxu0 0.0
        %1287 = vmatpush1.msra.mxu0 0.0
        %1288 = vmatprep.subr.mxu0 0.0
        %1289 = vmatpush1.msra.mxu0 0.0
        %1290 = vmatprep.subr.mxu0 0.0
        %1291 = vmatpush1.msra.mxu0 0.0
        %1292 = vmatprep.subr.mxu0 0.0
        %1293 = vmatpush1.msra.mxu0 0.0
        %1294 = vmatprep.subr.mxu0 0.0
        %1295 = vmatpush1.msra.mxu0 0.0
        %1296 = vmatprep.subr.mxu0 0.0
        %1297 = vmatpush1.msra.mxu0 0.0
        %1298 = vmatprep.subr.mxu0 0.0
        %1299 = vmatpush1.msra.mxu0 0.0
        %1300 = vmatprep.subr.mxu0 0.0
        %1301 = vmatpush1.msra.mxu0 0.0
        %1302 = vmatprep.subr.mxu0 0.0
        %1303 = vmatpush1.msra.mxu0 0.0
        %1304 = vmatprep.mubr.f32.mxu0 0.0
        %1305 = vmatmul.mubr.f32.gmra.mrb[0].mxu0 %v1238
        %v1306 = vpop.f32.mrb[0].mxu0
        %v1307 = vadd.f32 0.0, %v1306
        %v1308 = vpop.f32.mrb[0].mxu0
        %v1309 = vadd.f32 0.0, %v1308
        %1310 = vdwg.mxu0
        %v1311 = vadd.f32 %v1231, %v1307
        %v1312 = vadd.f32 %v1233, %v1309
        %1313 = vrot.lane.b32.xlu0 %v1311, 1
        %v1314 = vpop.permute.xlu0 %1313
        %1315 = vrot.lane.b32.xlu0 %v1312, 1
        %v1316 = vpop.permute.xlu0 %1315
        %v1317 = vsel %vm601, %v1314, %v1316
        %v1318 = vsel %vm601, %v1316, %v1314
        %v1319 = vmul.f32 %v607, %v1318
        %v1320 = vmul.f32 %v611, %v1317
        %s1321 = scalar_lea.vmem %s6, 8
        %v1322 = vld [vmem:[%s1321] sm:$0xff]
        %s1323 = scalar_lea.vmem %s6, 32
        %v1324 = vld [vmem:[%s1323] sm:$0xff]
        %v1326 = vsel %vm909, %v1324, 0
        %1328 = vmatprep.subr.mxu0 %v1075
        %1329 = vmatpush1.msra.mxu0 %v1074
        %1330 = vmatprep.subr.mxu0 0.0
        %1331 = vmatpush1.msra.mxu0 0.0
        %1332 = vmatprep.subr.mxu0 0.0
        %1333 = vmatpush1.msra.mxu0 0.0
        %1334 = vmatprep.subr.mxu0 0.0
        %1335 = vmatpush1.msra.mxu0 0.0
        %1336 = vmatprep.subr.mxu0 0.0
        %1337 = vmatpush1.msra.mxu0 0.0
        %1338 = vmatprep.subr.mxu0 0.0
        %1339 = vmatpush1.msra.mxu0 0.0
        %1340 = vmatprep.subr.mxu0 0.0
        %1341 = vmatpush1.msra.mxu0 0.0
        %1342 = vmatprep.subr.mxu0 0.0
        %1343 = vmatpush1.msra.mxu0 0.0
        %1344 = vmatprep.subr.mxu0 0.0
        %1345 = vmatpush1.msra.mxu0 0.0
        %1346 = vmatprep.subr.mxu0 0.0
        %1347 = vmatpush1.msra.mxu0 0.0
        %1348 = vmatprep.subr.mxu0 0.0
        %1349 = vmatpush1.msra.mxu0 0.0
        %1350 = vmatprep.subr.mxu0 0.0
        %1351 = vmatpush1.msra.mxu0 0.0
        %1352 = vmatprep.subr.mxu0 0.0
        %1353 = vmatpush1.msra.mxu0 0.0
        %1354 = vmatprep.subr.mxu0 0.0
        %1355 = vmatpush1.msra.mxu0 0.0
        %1356 = vmatprep.subr.mxu0 0.0
        %1357 = vmatpush1.msra.mxu0 0.0
        %1358 = vmatprep.subr.mxu0 0.0
        %1359 = vmatpush1.msra.mxu0 0.0
        %1360 = vmatprep.subr.mxu0 0.0
        %1361 = vmatpush1.msra.mxu0 0.0
        %1362 = vmatprep.subr.mxu0 0.0
        %1363 = vmatpush1.msra.mxu0 0.0
        %1364 = vmatprep.subr.mxu0 0.0
        %1365 = vmatpush1.msra.mxu0 0.0
        %1366 = vmatprep.subr.mxu0 0.0
        %1367 = vmatpush1.msra.mxu0 0.0
        %1368 = vmatprep.subr.mxu0 0.0
        %1369 = vmatpush1.msra.mxu0 0.0
        %1370 = vmatprep.subr.mxu0 0.0
        %1371 = vmatpush1.msra.mxu0 0.0
        %1372 = vmatprep.subr.mxu0 0.0
        %1373 = vmatpush1.msra.mxu0 0.0
        %1374 = vmatprep.subr.mxu0 0.0
        %1375 = vmatpush1.msra.mxu0 0.0
        %1376 = vmatprep.subr.mxu0 0.0
        %1377 = vmatpush1.msra.mxu0 0.0
        %1378 = vmatprep.subr.mxu0 0.0
        %1379 = vmatpush1.msra.mxu0 0.0
        %1380 = vmatprep.subr.mxu0 0.0
        %1381 = vmatpush1.msra.mxu0 0.0
        %1382 = vmatprep.subr.mxu0 0.0
        %1383 = vmatpush1.msra.mxu0 0.0
        %1384 = vmatprep.subr.mxu0 0.0
        %1385 = vmatpush1.msra.mxu0 0.0
        %1386 = vmatprep.subr.mxu0 0.0
        %1387 = vmatpush1.msra.mxu0 0.0
        %1388 = vmatprep.subr.mxu0 0.0
        %1389 = vmatpush1.msra.mxu0 0.0
        %1390 = vmatprep.subr.mxu0 0.0
        %1391 = vmatpush1.msra.mxu0 0.0
        %1392 = vmatprep.mubr.f32.mxu0 0.0
        %1393 = vmatmul.mubr.f32.gmra.mrb[0].mxu0 %v1326
        %v1394 = vpop.f32.mrb[0].mxu0
        %v1395 = vadd.f32 0.0, %v1394
        %v1396 = vpop.f32.mrb[0].mxu0
        %v1397 = vadd.f32 0.0, %v1396
        %1398 = vdwg.mxu0
        %v1400 = vsel %vm909, %v1322, 0
        %1402 = vmatprep.subr.mxu0 %v1073
        %1403 = vmatpush1.msra.mxu0 %v1072
        %1404 = vmatprep.subr.mxu0 0.0
        %1405 = vmatpush1.msra.mxu0 0.0
        %1406 = vmatprep.subr.mxu0 0.0
        %1407 = vmatpush1.msra.mxu0 0.0
        %1408 = vmatprep.subr.mxu0 0.0
        %1409 = vmatpush1.msra.mxu0 0.0
        %1410 = vmatprep.subr.mxu0 0.0
        %1411 = vmatpush1.msra.mxu0 0.0
        %1412 = vmatprep.subr.mxu0 0.0
        %1413 = vmatpush1.msra.mxu0 0.0
        %1414 = vmatprep.subr.mxu0 0.0
        %1415 = vmatpush1.msra.mxu0 0.0
        %1416 = vmatprep.subr.mxu0 0.0
        %1417 = vmatpush1.msra.mxu0 0.0
        %1418 = vmatprep.subr.mxu0 0.0
        %1419 = vmatpush1.msra.mxu0 0.0
        %1420 = vmatprep.subr.mxu0 0.0
        %1421 = vmatpush1.msra.mxu0 0.0
        %1422 = vmatprep.subr.mxu0 0.0
        %1423 = vmatpush1.msra.mxu0 0.0
        %1424 = vmatprep.subr.mxu0 0.0
        %1425 = vmatpush1.msra.mxu0 0.0
        %1426 = vmatprep.subr.mxu0 0.0
        %1427 = vmatpush1.msra.mxu0 0.0
        %1428 = vmatprep.subr.mxu0 0.0
        %1429 = vmatpush1.msra.mxu0 0.0
        %1430 = vmatprep.subr.mxu0 0.0
        %1431 = vmatpush1.msra.mxu0 0.0
        %1432 = vmatprep.subr.mxu0 0.0
        %1433 = vmatpush1.msra.mxu0 0.0
        %1434 = vmatprep.subr.mxu0 0.0
        %1435 = vmatpush1.msra.mxu0 0.0
        %1436 = vmatprep.subr.mxu0 0.0
        %1437 = vmatpush1.msra.mxu0 0.0
        %1438 = vmatprep.subr.mxu0 0.0
        %1439 = vmatpush1.msra.mxu0 0.0
        %1440 = vmatprep.subr.mxu0 0.0
        %1441 = vmatpush1.msra.mxu0 0.0
        %1442 = vmatprep.subr.mxu0 0.0
        %1443 = vmatpush1.msra.mxu0 0.0
        %1444 = vmatprep.subr.mxu0 0.0
        %1445 = vmatpush1.msra.mxu0 0.0
        %1446 = vmatprep.subr.mxu0 0.0
        %1447 = vmatpush1.msra.mxu0 0.0
        %1448 = vmatprep.subr.mxu0 0.0
        %1449 = vmatpush1.msra.mxu0 0.0
        %1450 = vmatprep.subr.mxu0 0.0
        %1451 = vmatpush1.msra.mxu0 0.0
        %1452 = vmatprep.subr.mxu0 0.0
        %1453 = vmatpush1.msra.mxu0 0.0
        %1454 = vmatprep.subr.mxu0 0.0
        %1455 = vmatpush1.msra.mxu0 0.0
        %1456 = vmatprep.subr.mxu0 0.0
        %1457 = vmatpush1.msra.mxu0 0.0
        %1458 = vmatprep.subr.mxu0 0.0
        %1459 = vmatpush1.msra.mxu0 0.0
        %1460 = vmatprep.subr.mxu0 0.0
        %1461 = vmatpush1.msra.mxu0 0.0
        %1462 = vmatprep.subr.mxu0 0.0
        %1463 = vmatpush1.msra.mxu0 0.0
        %1464 = vmatprep.subr.mxu0 0.0
        %1465 = vmatpush1.msra.mxu0 0.0
        %1466 = vmatprep.mubr.f32.mxu0 0.0
        %1467 = vmatmul.mubr.f32.gmra.mrb[0].mxu0 %v1400
        %v1468 = vpop.f32.mrb[0].mxu0
        %v1469 = vadd.f32 %v1395, %v1468
        %v1470 = vpop.f32.mrb[0].mxu0
        %v1471 = vadd.f32 %v1397, %v1470
        %1472 = vdwg.mxu0
        %s1473 = scalar_lea.vmem %s6, 56
        %v1474 = vld [vmem:[%s1473] sm:$0xff]
        %v1476 = vsel %vm909, %v1474, 0
        %1478 = vmatprep.subr.mxu0 %v1083
        %1479 = vmatpush1.msra.mxu0 %v1082
        %1480 = vmatprep.subr.mxu0 0.0
        %1481 = vmatpush1.msra.mxu0 0.0
        %1482 = vmatprep.subr.mxu0 0.0
        %1483 = vmatpush1.msra.mxu0 0.0
        %1484 = vmatprep.subr.mxu0 0.0
        %1485 = vmatpush1.msra.mxu0 0.0
        %1486 = vmatprep.subr.mxu0 0.0
        %1487 = vmatpush1.msra.mxu0 0.0
        %1488 = vmatprep.subr.mxu0 0.0
        %1489 = vmatpush1.msra.mxu0 0.0
        %1490 = vmatprep.subr.mxu0 0.0
        %1491 = vmatpush1.msra.mxu0 0.0
        %1492 = vmatprep.subr.mxu0 0.0
        %1493 = vmatpush1.msra.mxu0 0.0
        %1494 = vmatprep.subr.mxu0 0.0
        %1495 = vmatpush1.msra.mxu0 0.0
        %1496 = vmatprep.subr.mxu0 0.0
        %1497 = vmatpush1.msra.mxu0 0.0
        %1498 = vmatprep.subr.mxu0 0.0
        %1499 = vmatpush1.msra.mxu0 0.0
        %1500 = vmatprep.subr.mxu0 0.0
        %1501 = vmatpush1.msra.mxu0 0.0
        %1502 = vmatprep.subr.mxu0 0.0
        %1503 = vmatpush1.msra.mxu0 0.0
        %1504 = vmatprep.subr.mxu0 0.0
        %1505 = vmatpush1.msra.mxu0 0.0
        %1506 = vmatprep.subr.mxu0 0.0
        %1507 = vmatpush1.msra.mxu0 0.0
        %1508 = vmatprep.subr.mxu0 0.0
        %1509 = vmatpush1.msra.mxu0 0.0
        %1510 = vmatprep.subr.mxu0 0.0
        %1511 = vmatpush1.msra.mxu0 0.0
        %1512 = vmatprep.subr.mxu0 0.0
        %1513 = vmatpush1.msra.mxu0 0.0
        %1514 = vmatprep.subr.mxu0 0.0
        %1515 = vmatpush1.msra.mxu0 0.0
        %1516 = vmatprep.subr.mxu0 0.0
        %1517 = vmatpush1.msra.mxu0 0.0
        %1518 = vmatprep.subr.mxu0 0.0
        %1519 = vmatpush1.msra.mxu0 0.0
        %1520 = vmatprep.subr.mxu0 0.0
        %1521 = vmatpush1.msra.mxu0 0.0
        %1522 = vmatprep.subr.mxu0 0.0
        %1523 = vmatpush1.msra.mxu0 0.0
        %1524 = vmatprep.subr.mxu0 0.0
        %1525 = vmatpush1.msra.mxu0 0.0
        %1526 = vmatprep.subr.mxu0 0.0
        %1527 = vmatpush1.msra.mxu0 0.0
        %1528 = vmatprep.subr.mxu0 0.0
        %1529 = vmatpush1.msra.mxu0 0.0
        %1530 = vmatprep.subr.mxu0 0.0
        %1531 = vmatpush1.msra.mxu0 0.0
        %1532 = vmatprep.subr.mxu0 0.0
        %1533 = vmatpush1.msra.mxu0 0.0
        %1534 = vmatprep.subr.mxu0 0.0
        %1535 = vmatpush1.msra.mxu0 0.0
        %1536 = vmatprep.subr.mxu0 0.0
        %1537 = vmatpush1.msra.mxu0 0.0
        %1538 = vmatprep.subr.mxu0 0.0
        %1539 = vmatpush1.msra.mxu0 0.0
        %1540 = vmatprep.subr.mxu0 0.0
        %1541 = vmatpush1.msra.mxu0 0.0
        %1542 = vmatprep.mubr.f32.mxu0 0.0
        %1543 = vmatmul.mubr.f32.gmra.mrb[0].mxu0 %v1476
        %v1544 = vpop.f32.mrb[0].mxu0
        %v1545 = vadd.f32 0.0, %v1544
        %v1546 = vpop.f32.mrb[0].mxu0
        %v1547 = vadd.f32 0.0, %v1546
        %1548 = vdwg.mxu0
        %v1549 = vadd.f32 %v1469, %v1545
        %v1550 = vadd.f32 %v1471, %v1547
        %v1551 = vmul.f32 %v673, %v1549
        %v1552 = vmul.f32 %v677, %v1550
        %v1553 = vadd.f32 %v1319, %v1551
        %v1554 = vadd.f32 %v1320, %v1552
        %s1555 = scalar_lea.vmem %s6, 16
        %v1556 = vld [vmem:[%s1555] sm:$0xff]
        %s1557 = scalar_lea.vmem %s6, 40
        %v1558 = vld [vmem:[%s1557] sm:$0xff]
        %v1560 = vsel %vm909, %v1558, 0
        %1562 = vmatprep.subr.mxu0 %v1075
        %1563 = vmatpush1.msra.mxu0 %v1074
        %1564 = vmatprep.subr.mxu0 0.0
        %1565 = vmatpush1.msra.mxu0 0.0
        %1566 = vmatprep.subr.mxu0 0.0
        %1567 = vmatpush1.msra.mxu0 0.0
        %1568 = vmatprep.subr.mxu0 0.0
        %1569 = vmatpush1.msra.mxu0 0.0
        %1570 = vmatprep.subr.mxu0 0.0
        %1571 = vmatpush1.msra.mxu0 0.0
        %1572 = vmatprep.subr.mxu0 0.0
        %1573 = vmatpush1.msra.mxu0 0.0
        %1574 = vmatprep.subr.mxu0 0.0
        %1575 = vmatpush1.msra.mxu0 0.0
        %1576 = vmatprep.subr.mxu0 0.0
        %1577 = vmatpush1.msra.mxu0 0.0
        %1578 = vmatprep.subr.mxu0 0.0
        %1579 = vmatpush1.msra.mxu0 0.0
        %1580 = vmatprep.subr.mxu0 0.0
        %1581 = vmatpush1.msra.mxu0 0.0
        %1582 = vmatprep.subr.mxu0 0.0
        %1583 = vmatpush1.msra.mxu0 0.0
        %1584 = vmatprep.subr.mxu0 0.0
        %1585 = vmatpush1.msra.mxu0 0.0
        %1586 = vmatprep.subr.mxu0 0.0
        %1587 = vmatpush1.msra.mxu0 0.0
        %1588 = vmatprep.subr.mxu0 0.0
        %1589 = vmatpush1.msra.mxu0 0.0
        %1590 = vmatprep.subr.mxu0 0.0
        %1591 = vmatpush1.msra.mxu0 0.0
        %1592 = vmatprep.subr.mxu0 0.0
        %1593 = vmatpush1.msra.mxu0 0.0
        %1594 = vmatprep.subr.mxu0 0.0
        %1595 = vmatpush1.msra.mxu0 0.0
        %1596 = vmatprep.subr.mxu0 0.0
        %1597 = vmatpush1.msra.mxu0 0.0
        %1598 = vmatprep.subr.mxu0 0.0
        %1599 = vmatpush1.msra.mxu0 0.0
        %1600 = vmatprep.subr.mxu0 0.0
        %1601 = vmatpush1.msra.mxu0 0.0
        %1602 = vmatprep.subr.mxu0 0.0
        %1603 = vmatpush1.msra.mxu0 0.0
        %1604 = vmatprep.subr.mxu0 0.0
        %1605 = vmatpush1.msra.mxu0 0.0
        %1606 = vmatprep.subr.mxu0 0.0
        %1607 = vmatpush1.msra.mxu0 0.0
        %1608 = vmatprep.subr.mxu0 0.0
        %1609 = vmatpush1.msra.mxu0 0.0
        %1610 = vmatprep.subr.mxu0 0.0
        %1611 = vmatpush1.msra.mxu0 0.0
        %1612 = vmatprep.subr.mxu0 0.0
        %1613 = vmatpush1.msra.mxu0 0.0
        %1614 = vmatprep.subr.mxu0 0.0
        %1615 = vmatpush1.msra.mxu0 0.0
        %1616 = vmatprep.subr.mxu0 0.0
        %1617 = vmatpush1.msra.mxu0 0.0
        %1618 = vmatprep.subr.mxu0 0.0
        %1619 = vmatpush1.msra.mxu0 0.0
        %1620 = vmatprep.subr.mxu0 0.0
        %1621 = vmatpush1.msra.mxu0 0.0
        %1622 = vmatprep.subr.mxu0 0.0
        %1623 = vmatpush1.msra.mxu0 0.0
        %1624 = vmatprep.subr.mxu0 0.0
        %1625 = vmatpush1.msra.mxu0 0.0
        %1626 = vmatprep.mubr.f32.mxu0 0.0
        %1627 = vmatmul.mubr.f32.gmra.mrb[0].mxu0 %v1560
        %v1628 = vpop.f32.mrb[0].mxu0
        %v1629 = vadd.f32 0.0, %v1628
        %v1630 = vpop.f32.mrb[0].mxu0
        %v1631 = vadd.f32 0.0, %v1630
        %1632 = vdwg.mxu0
        %v1634 = vsel %vm909, %v1556, 0
        %1636 = vmatprep.subr.mxu0 %v1073
        %1637 = vmatpush1.msra.mxu0 %v1072
        %1638 = vmatprep.subr.mxu0 0.0
        %1639 = vmatpush1.msra.mxu0 0.0
        %1640 = vmatprep.subr.mxu0 0.0
        %1641 = vmatpush1.msra.mxu0 0.0
        %1642 = vmatprep.subr.mxu0 0.0
        %1643 = vmatpush1.msra.mxu0 0.0
        %1644 = vmatprep.subr.mxu0 0.0
        %1645 = vmatpush1.msra.mxu0 0.0
        %1646 = vmatprep.subr.mxu0 0.0
        %1647 = vmatpush1.msra.mxu0 0.0
        %1648 = vmatprep.subr.mxu0 0.0
        %1649 = vmatpush1.msra.mxu0 0.0
        %1650 = vmatprep.subr.mxu0 0.0
        %1651 = vmatpush1.msra.mxu0 0.0
        %1652 = vmatprep.subr.mxu0 0.0
        %1653 = vmatpush1.msra.mxu0 0.0
        %1654 = vmatprep.subr.mxu0 0.0
        %1655 = vmatpush1.msra.mxu0 0.0
        %1656 = vmatprep.subr.mxu0 0.0
        %1657 = vmatpush1.msra.mxu0 0.0
        %1658 = vmatprep.subr.mxu0 0.0
        %1659 = vmatpush1.msra.mxu0 0.0
        %1660 = vmatprep.subr.mxu0 0.0
        %1661 = vmatpush1.msra.mxu0 0.0
        %1662 = vmatprep.subr.mxu0 0.0
        %1663 = vmatpush1.msra.mxu0 0.0
        %1664 = vmatprep.subr.mxu0 0.0
        %1665 = vmatpush1.msra.mxu0 0.0
        %1666 = vmatprep.subr.mxu0 0.0
        %1667 = vmatpush1.msra.mxu0 0.0
        %1668 = vmatprep.subr.mxu0 0.0
        %1669 = vmatpush1.msra.mxu0 0.0
        %1670 = vmatprep.subr.mxu0 0.0
        %1671 = vmatpush1.msra.mxu0 0.0
        %1672 = vmatprep.subr.mxu0 0.0
        %1673 = vmatpush1.msra.mxu0 0.0
        %1674 = vmatprep.subr.mxu0 0.0
        %1675 = vmatpush1.msra.mxu0 0.0
        %1676 = vmatprep.subr.mxu0 0.0
        %1677 = vmatpush1.msra.mxu0 0.0
        %1678 = vmatprep.subr.mxu0 0.0
        %1679 = vmatpush1.msra.mxu0 0.0
        %1680 = vmatprep.subr.mxu0 0.0
        %1681 = vmatpush1.msra.mxu0 0.0
        %1682 = vmatprep.subr.mxu0 0.0
        %1683 = vmatpush1.msra.mxu0 0.0
        %1684 = vmatprep.subr.mxu0 0.0
        %1685 = vmatpush1.msra.mxu0 0.0
        %1686 = vmatprep.subr.mxu0 0.0
        %1687 = vmatpush1.msra.mxu0 0.0
        %1688 = vmatprep.subr.mxu0 0.0
        %1689 = vmatpush1.msra.mxu0 0.0
        %1690 = vmatprep.subr.mxu0 0.0
        %1691 = vmatpush1.msra.mxu0 0.0
        %1692 = vmatprep.subr.mxu0 0.0
        %1693 = vmatpush1.msra.mxu0 0.0
        %1694 = vmatprep.subr.mxu0 0.0
        %1695 = vmatpush1.msra.mxu0 0.0
        %1696 = vmatprep.subr.mxu0 0.0
        %1697 = vmatpush1.msra.mxu0 0.0
        %1698 = vmatprep.subr.mxu0 0.0
        %1699 = vmatpush1.msra.mxu0 0.0
        %1700 = vmatprep.mubr.f32.mxu0 0.0
        %1701 = vmatmul.mubr.f32.gmra.mrb[0].mxu0 %v1634
        %v1702 = vpop.f32.mrb[0].mxu0
        %v1703 = vadd.f32 %v1629, %v1702
        %v1704 = vpop.f32.mrb[0].mxu0
        %v1705 = vadd.f32 %v1631, %v1704
        %1706 = vdwg.mxu0
        %s1707 = scalar_lea.vmem %s6, 64
        %v1708 = vld [vmem:[%s1707] sm:$0xff]
        %v1710 = vsel %vm909, %v1708, 0
        %1712 = vmatprep.subr.mxu0 %v1083
        %1713 = vmatpush1.msra.mxu0 %v1082
        %1714 = vmatprep.subr.mxu0 0.0
        %1715 = vmatpush1.msra.mxu0 0.0
        %1716 = vmatprep.subr.mxu0 0.0
        %1717 = vmatpush1.msra.mxu0 0.0
        %1718 = vmatprep.subr.mxu0 0.0
        %1719 = vmatpush1.msra.mxu0 0.0
        %1720 = vmatprep.subr.mxu0 0.0
        %1721 = vmatpush1.msra.mxu0 0.0
        %1722 = vmatprep.subr.mxu0 0.0
        %1723 = vmatpush1.msra.mxu0 0.0
        %1724 = vmatprep.subr.mxu0 0.0
        %1725 = vmatpush1.msra.mxu0 0.0
        %1726 = vmatprep.subr.mxu0 0.0
        %1727 = vmatpush1.msra.mxu0 0.0
        %1728 = vmatprep.subr.mxu0 0.0
        %1729 = vmatpush1.msra.mxu0 0.0
        %1730 = vmatprep.subr.mxu0 0.0
        %1731 = vmatpush1.msra.mxu0 0.0
        %1732 = vmatprep.subr.mxu0 0.0
        %1733 = vmatpush1.msra.mxu0 0.0
        %1734 = vmatprep.subr.mxu0 0.0
        %1735 = vmatpush1.msra.mxu0 0.0
        %1736 = vmatprep.subr.mxu0 0.0
        %1737 = vmatpush1.msra.mxu0 0.0
        %1738 = vmatprep.subr.mxu0 0.0
        %1739 = vmatpush1.msra.mxu0 0.0
        %1740 = vmatprep.subr.mxu0 0.0
        %1741 = vmatpush1.msra.mxu0 0.0
        %1742 = vmatprep.subr.mxu0 0.0
        %1743 = vmatpush1.msra.mxu0 0.0
        %1744 = vmatprep.subr.mxu0 0.0
        %1745 = vmatpush1.msra.mxu0 0.0
        %1746 = vmatprep.subr.mxu0 0.0
        %1747 = vmatpush1.msra.mxu0 0.0
        %1748 = vmatprep.subr.mxu0 0.0
        %1749 = vmatpush1.msra.mxu0 0.0
        %1750 = vmatprep.subr.mxu0 0.0
        %1751 = vmatpush1.msra.mxu0 0.0
        %1752 = vmatprep.subr.mxu0 0.0
        %1753 = vmatpush1.msra.mxu0 0.0
        %1754 = vmatprep.subr.mxu0 0.0
        %1755 = vmatpush1.msra.mxu0 0.0
        %1756 = vmatprep.subr.mxu0 0.0
        %1757 = vmatpush1.msra.mxu0 0.0
        %1758 = vmatprep.subr.mxu0 0.0
        %1759 = vmatpush1.msra.mxu0 0.0
        %1760 = vmatprep.subr.mxu0 0.0
        %1761 = vmatpush1.msra.mxu0 0.0
        %1762 = vmatprep.subr.mxu0 0.0
        %1763 = vmatpush1.msra.mxu0 0.0
        %1764 = vmatprep.subr.mxu0 0.0
        %1765 = vmatpush1.msra.mxu0 0.0
        %1766 = vmatprep.subr.mxu0 0.0
        %1767 = vmatpush1.msra.mxu0 0.0
        %1768 = vmatprep.subr.mxu0 0.0
        %1769 = vmatpush1.msra.mxu0 0.0
        %1770 = vmatprep.subr.mxu0 0.0
        %1771 = vmatpush1.msra.mxu0 0.0
        %1772 = vmatprep.subr.mxu0 0.0
        %1773 = vmatpush1.msra.mxu0 0.0
        %1774 = vmatprep.subr.mxu0 0.0
        %1775 = vmatpush1.msra.mxu0 0.0
        %1776 = vmatprep.mubr.f32.mxu0 0.0
        %1777 = vmatmul.mubr.f32.gmra.mrb[0].mxu0 %v1710
        %v1778 = vpop.f32.mrb[0].mxu0
        %v1779 = vadd.f32 0.0, %v1778
        %v1780 = vpop.f32.mrb[0].mxu0
        %v1781 = vadd.f32 0.0, %v1780
        %1782 = vdwg.mxu0
        %v1783 = vadd.f32 %v1703, %v1779
        %v1784 = vadd.f32 %v1705, %v1781
        %1785 = vrot.lane.b32.xlu0 %v1783, 127
        %v1786 = vpop.permute.xlu0 %1785
        %1787 = vrot.lane.b32.xlu0 %v1784, 127
        %v1788 = vpop.permute.xlu0 %1787
        %v1789 = vsel %vm740, %v1786, %v1788
        %v1790 = vsel %vm740, %v1788, %v1786
        %v1791 = vmul.f32 %v746, %v1789
        %v1792 = vmul.f32 %v750, %v1790
        %v1793 = vadd.f32 %v1553, %v1791
        %v1794 = vadd.f32 %v1554, %v1792
        %1795 = vset.pattern.permute.xlu0 61
        %1796 = vperm.xlu0 %1795, %v283
        %v1797 = vpop.permute.xlu0 %1796
        %v1799 = vadd.f32 %v1793, %v1797
        %v1800 = vadd.f32 %v1794, %v1797
        %v1801 = vmax.f32 %v1799, 0.0
        %v1802 = vmax.f32 %v1800, 0.0
        %1803 = vset.pattern.permute.xlu0 62
        %1804 = vperm.xlu0 %1803, %v283
        %v1805 = vpop.permute.xlu0 %1804
        %v1807 = vmul.f32 %v1805, %v1801
        %v1808 = vmul.f32 %v1805, %v1802
        %v1809 = vrot.slane %v1807, 4
        %v1810 = vadd.f32 %v1807, %v1809
        %v1811 = vrot.slane %v1810, 2
        %v1812 = vadd.f32 %v1810, %v1811
        %v1813 = vrot.slane %v1812, 1
        %v1814 = vadd.f32 %v1812, %v1813
        %v1815 = vrot.slane %v1808, 4
        %v1816 = vadd.f32 %v1808, %v1815
        %v1817 = vrot.slane %v1816, 2
        %v1818 = vadd.f32 %v1816, %v1817
        %v1819 = vrot.slane %v1818, 1
        %v1820 = vadd.f32 %v1818, %v1819
        %1821 = vset.pattern.permute.xlu0 64
        %1822 = vperm.xlu0 %1821, %v283
        %v1823 = vpop.permute.xlu0 %1822
        %v1825 = vadd.f32 %v1814, %v1823
        %v1826 = vadd.f32 %v1820, %v1823
        %v1827 = vxor.u32 %v1825, 2147483648
        %v1828 = vxor.u32 %v1826, 2147483648
        %v1829 = vmul.f32 %v1827, 1.442695
        %v1830 = vpow.pop %v1829
        %v1831 = vmul.f32 %v1828, 1.442695
        %v1832 = vpow.pop %v1831
        %v1833 = vadd.f32 %v1830, 1.0
        %v1834 = vadd.f32 %v1832, 1.0
        %v1835 = vrcp.pop %v1833
        %v1836 = vmul.f32 1.0, %v1835
        %v1837 = vrcp.pop %v1834
        %v1838 = vmul.f32 1.0, %v1837
        %1839 = vset.pattern.permute.xlu0 49
        %1840 = vperm.xlu0 %1839, %v283
        %v1841 = vpop.permute.xlu0 %1840
        %v1843 = vmul.f32 %v1841, %v335
        %v1844 = vmul.f32 %v1841, %v336
        %1845 = vset.pattern.permute.xlu0 52
        %1846 = vperm.xlu0 %1845, %v283
        %v1847 = vpop.permute.xlu0 %1846
        %v1849 = vmul.f32 %v1847, %v345
        %v1850 = vmul.f32 %v1847, %v346
        %v1851 = vadd.f32 %v1843, %v1849
        %v1852 = vadd.f32 %v1844, %v1850
        %1853 = vset.pattern.permute.xlu0 55
        %1854 = vperm.xlu0 %1853, %v283
        %v1855 = vpop.permute.xlu0 %1854
        %v1857 = vmul.f32 %v1855, %v362
        %v1858 = vmul.f32 %v1855, %v363
        %v1859 = vadd.f32 %v1851, %v1857
        %v1860 = vadd.f32 %v1852, %v1858
        %1861 = vrot.lane.b32.xlu0 %v1859, 1
        %v1862 = vpop.permute.xlu0 %1861
        %1863 = vrot.lane.b32.xlu0 %v1860, 1
        %v1864 = vpop.permute.xlu0 %1863
        %v1865 = vsel %vm601, %v1862, %v1864
        %v1866 = vsel %vm601, %v1864, %v1862
        %v1867 = vmul.f32 %v607, %v1866
        %v1868 = vmul.f32 %v611, %v1865
        %1869 = vset.pattern.permute.xlu0 50
        %1870 = vperm.xlu0 %1869, %v283
        %v1871 = vpop.permute.xlu0 %1870
        %v1873 = vmul.f32 %v1871, %v335
        %v1874 = vmul.f32 %v1871, %v336
        %1875 = vset.pattern.permute.xlu0 53
        %1876 = vperm.xlu0 %1875, %v283
        %v1877 = vpop.permute.xlu0 %1876
        %v1879 = vmul.f32 %v1877, %v345
        %v1880 = vmul.f32 %v1877, %v346
        %v1881 = vadd.f32 %v1873, %v1879
        %v1882 = vadd.f32 %v1874, %v1880
        %1883 = vset.pattern.permute.xlu0 56
        %1884 = vperm.xlu0 %1883, %v283
        %v1885 = vpop.permute.xlu0 %1884
        %v1887 = vmul.f32 %v1885, %v362
        %v1888 = vmul.f32 %v1885, %v363
        %v1889 = vadd.f32 %v1881, %v1887
        %v1890 = vadd.f32 %v1882, %v1888
        %v1891 = vmul.f32 %v673, %v1889
        %v1892 = vmul.f32 %v677, %v1890
        %v1893 = vadd.f32 %v1867, %v1891
        %v1894 = vadd.f32 %v1868, %v1892
        %1895 = vset.pattern.permute.xlu0 51
        %1896 = vperm.xlu0 %1895, %v283
        %v1897 = vpop.permute.xlu0 %1896
        %v1899 = vmul.f32 %v1897, %v335
        %v1900 = vmul.f32 %v1897, %v336
        %1901 = vset.pattern.permute.xlu0 54
        %1902 = vperm.xlu0 %1901, %v283
        %v1903 = vpop.permute.xlu0 %1902
        %v1905 = vmul.f32 %v1903, %v345
        %v1906 = vmul.f32 %v1903, %v346
        %v1907 = vadd.f32 %v1899, %v1905
        %v1908 = vadd.f32 %v1900, %v1906
        %1909 = vset.pattern.permute.xlu0 57
        %1910 = vperm.xlu0 %1909, %v283
        %v1911 = vpop.permute.xlu0 %1910
        %v1913 = vmul.f32 %v1911, %v362
        %v1914 = vmul.f32 %v1911, %v363
        %v1915 = vadd.f32 %v1907, %v1913
        %v1916 = vadd.f32 %v1908, %v1914
        %1917 = vrot.lane.b32.xlu0 %v1915, 127
        %v1918 = vpop.permute.xlu0 %1917
        %1919 = vrot.lane.b32.xlu0 %v1916, 127
        %v1920 = vpop.permute.xlu0 %1919
        %v1921 = vsel %vm740, %v1918, %v1920
        %v1922 = vsel %vm740, %v1920, %v1918
        %v1923 = vmul.f32 %v746, %v1921
        %v1924 = vmul.f32 %v750, %v1922
        %v1925 = vadd.f32 %v1893, %v1923
        %v1926 = vadd.f32 %v1894, %v1924
        %1927 = vset.pattern.permute.xlu0 59
        %1928 = vperm.xlu0 %1927, %v283
        %v1929 = vpop.permute.xlu0 %1928
        %v1931 = vadd.f32 %v1925, %v1929
        %v1932 = vadd.f32 %v1926, %v1929
        %1933 = vset.pattern.permute.xlu0 63
        %1934 = vperm.xlu0 %1933, %v283
        %v1935 = vpop.permute.xlu0 %1934
        %v1937 = vmul.f32 %v1935, %v1931
        %v1938 = vmul.f32 %v1935, %v1932
        %v1939 = vrot.slane %v1937, 4
        %v1940 = vadd.f32 %v1937, %v1939
        %v1941 = vrot.slane %v1940, 2
        %v1942 = vadd.f32 %v1940, %v1941
        %v1943 = vrot.slane %v1942, 1
        %v1944 = vadd.f32 %v1942, %v1943
        %v1945 = vrot.slane %v1938, 4
        %v1946 = vadd.f32 %v1938, %v1945
        %v1947 = vrot.slane %v1946, 2
        %v1948 = vadd.f32 %v1946, %v1947
        %v1949 = vrot.slane %v1948, 1
        %v1950 = vadd.f32 %v1948, %v1949
        %1951 = vset.pattern.permute.xlu0 65
        %1952 = vperm.xlu0 %1951, %v283
        %v1953 = vpop.permute.xlu0 %1952
        %v1955 = vadd.f32 %v1944, %v1953
        %v1956 = vadd.f32 %v1950, %v1953
        %v1957 = vxor.u32 %v1955, 2147483648
        %v1958 = vxor.u32 %v1956, 2147483648
        %v1959 = vmul.f32 %v1957, 1.442695
        %v1960 = vpow.pop %v1959
        %v1961 = vmul.f32 %v1958, 1.442695
        %v1962 = vpow.pop %v1961
        %v1963 = vadd.f32 %v1960, 1.0
        %v1964 = vadd.f32 %v1962, 1.0
        %v1965 = vrcp.pop %v1963
        %v1966 = vmul.f32 1.0, %v1965
        %v1967 = vrcp.pop %v1964
        %v1968 = vmul.f32 1.0, %v1967
        %v1969 = vadd.f32 %v1966, 1.0
        %v1970 = vadd.f32 %v1968, 1.0
        %v1971 = vmul.f32 %v1836, %v1969
        %v1972 = vmul.f32 %v1838, %v1970
        %v1973 = vlaneseq
        %v1974 = vshrl.u32 %v1973, 7
        %v1975 = vsub.s32 0, %v1974
        %v1976 = vrot.slane %v1971, %v1975
        %v1977 = vlaneseq
        %v1978 = vshrl.u32 %v1977, 7
        %v1979 = vsub.s32 0, %v1978
        %v1980 = vrot.slane %v1972, %v1979
        %v1981 = vmul.f32 %v277, %v1976
        %v1982 = vmul.f32 %v278, %v1980
        %1983 = vst [vmem:[%s271] sm:$0xff] %v1981
        %1984 = vst [vmem:[%s271 + $0x8] sm:$0xff] %v1982
        %s1985 = sand.u32 %s181, 1
        %s1986 = scalar_lea.sflag [#allocation3], %s1985
        %s1987 = sand.u32 %s181, 1
        %s1988 = smul.addr %s1987, 16
        %s1989 = scalar_lea.vmem [#allocation2], %s1988
        // Predicated region
        $region49: #{tpu_custom_call.1} parent=47 // pred_check
          %p1990 = pneg %p191
        $region50: #{tpu_custom_call.1} parent=47 // pred_check_branch
          %1992 = sbr.rel (%p1990) target = $region52
        $region51: #{tpu_custom_call.1} parent=47 // pred_region
          %s1994 = ssub.s32 256, 256
          %1995 = vsyncadd %s1986, %s1994
          %s1996 = smul.addr %s21, 2
          %s1997 = smul.addr %s1996, 128
          %s1998 = scalar_lea.hbm %s7, %s1997
          %s2000 = sshll.u32 %s1989, 4
          %s2001 = int_to_ptr.vmem [resolvable:$true] %s2000
          %2003 = dma.vmem_to_hbm [thread:$0]  %s2001, 256, %s1998, %s1986
        $region52: #{tpu_custom_call.1} parent=47 // pred_fallthru
          _
      $region48: #{tpu_custom_call.1} parent=5 // pred_fallthru
        _
      %p2004 = scmp.le.s32.totalorder 2, %s16
      // Predicated region
      $region53: #{tpu_custom_call.1} parent=5 // pred_check
        %p2005 = pneg %p2004
      $region54: #{tpu_custom_call.1} parent=5 // pred_check_branch
        %2007 = sbr.rel (%p2005) target = $region56
      $region55: #{tpu_custom_call.1} parent=5 // pred_region
        %s2008 = ssub.s32 %s16, 2
        // Predicated region
        $region57: #{tpu_custom_call.1} parent=55 // pred_check
          %p2009 = pneg %p197
        $region58: #{tpu_custom_call.1} parent=55 // pred_check_branch
          %2011 = sbr.rel (%p2009) target = $region60
        $region59: #{tpu_custom_call.1} parent=55 // pred_region
          %s2012 = sand.u32 %s182, 1
          %s2013 = scalar_lea.sflag [#allocation3], %s2012
          %s2014 = sand.u32 %s182, 1
          %s2015 = smul.addr %s2014, 16
          %s2016 = scalar_lea.vmem [#allocation2], %s2015
          %2017 = dma.done %s2013, 256
        $region60: #{tpu_custom_call.1} parent=55 // pred_fallthru
          _
      $region56: #{tpu_custom_call.1} parent=5 // pred_fallthru
        _
    $region6: #{tpu_custom_call.1} parent=1 // loop_footer
      %s20 = sadd.s32 1, %s16
    $region7: #{tpu_custom_call.1} parent=1 // loop_footer_branch
      %15 = sbr.rel target = $region3
    $region8: #{tpu_custom_call.1} parent=1 // loop_exit
      _
    %2018 = vsyncpa [#allocation3], 1
    %s2019 = scalar_lea.sflag [#allocation3], 1
    %2020 = vsyncpa %s2019, 1

</llo_original>
